<compile_context>
chip_gen: v6e
topology: v6e:2x2x1
jax: 0.10.0
libtpu: 0.0.40
codegen_flags: <defaults>
</compile_context>

<pallas_src>
import functools

import jax
import jax.numpy as jnp
from jax.experimental import pallas as pl
from jax.experimental.pallas import tpu as pltpu


def _part_contrast_kernel(feat_ref, lab_row_ref, lab_col_ref, out_ref,
                          xc_ref, x2_ref, acc_ref, *,
                          pos_margin, neg_margin, gram_precision,
                          tile_j, m_pad, m_valid):
    j = pl.program_id(1)

    # ---- once per part-block (first column panel): center the features,
    # compute squared norms, zero the stats accumulator.  Mean-centering is
    # distance-invariant and bounds the cancellation in
    # dist2 = |x_i|^2 + |x_j|^2 - 2<x_i, x_j> (key for the bf16 input path).
    @pl.when(j == 0)
    def _():
        xf = feat_ref[...].astype(jnp.float32)                    # (BN, Mp, D)
        mean = jnp.sum(xf, axis=1, keepdims=True) * (1.0 / m_valid)
        xc = (xf - mean).astype(xc_ref.dtype)
        xc_ref[...] = xc
        xcf = xc.astype(jnp.float32)
        x2_ref[...] = jnp.sum(xcf * xcf, axis=2, keepdims=True)   # (BN, Mp, 1)
        acc_ref[...] = jnp.zeros_like(acc_ref)

    xc_full = xc_ref[...]                                         # (BN, Mp, D)
    x2_col = x2_ref[...]                                          # (BN, Mp, 1)

    if tile_j == m_pad:
        # Single panel: the whole row block is the column block too.
        col0 = 0
        xc_panel = xc_full
        x2_panel = x2_col
    else:
        # Column panel j: bounds the (m, m) intermediates to (m, tile_j).
        col0 = pl.multiple_of(j * tile_j, tile_j)
        xc_panel = xc_ref[:, pl.ds(col0, tile_j), :]              # (BN, Tj, D)
        x2_panel = x2_ref[:, pl.ds(col0, tile_j), :]              # (BN, Tj, 1)

    # Batched Gram panel on the MXU: s[b, i, j] = <xc_bi, xc_bj>, f32 acc.
    s = jax.lax.dot_general(
        xc_full, xc_panel,
        dimension_numbers=(((2,), (2,)), ((0,), (0,))),
        precision=gram_precision,
        preferred_element_type=jnp.float32)                       # (BN, Mp, Tj)

    x2_row = jnp.transpose(x2_panel, (0, 2, 1))                   # (BN, 1, Tj)
    dist2 = x2_col + x2_row - 2.0 * s
    dist = jnp.sqrt(jnp.maximum(dist2, 0.0))                      # (BN, Mp, Tj)

    eq = lab_col_ref[...] == lab_row_ref[...]                     # (BN, Mp, Tj)

    # Fused hp/hn chain: one select + one relu; hn stats by subtraction, so no
    # separate full-size hn tensors are materialized.
    t = jnp.where(eq, dist - pos_margin, neg_margin - dist)
    lv = jnp.maximum(t, 0.0)
    if m_pad != m_valid:
        # Mask out zero-padded rows / columns (only present when panel-tiling
        # padded m up to a multiple of tile_j).
        row_ids = jax.lax.broadcasted_iota(jnp.int32, (1, m_pad, 1), 1)
        col_ids = col0 + jax.lax.broadcasted_iota(jnp.int32, (1, 1, tile_j), 2)
        lv = jnp.where((row_ids < m_valid) & (col_ids < m_valid), lv, 0.0)
    cnt = (lv > 0.0).astype(jnp.float32)
    hp_v = jnp.where(eq, lv, 0.0)
    hp_c = jnp.where(eq, cnt, 0.0)

    def _psum(a):  # (BN, Mp, Tj) -> (BN, 1, 1)
        return jnp.sum(jnp.sum(a, axis=2, keepdims=True), axis=1, keepdims=True)

    tot_s = _psum(lv)
    tot_c = _psum(cnt)
    hp_s = _psum(hp_v)
    hp_cn = _psum(hp_c)

    acc_ref[:, :, 0:1] += hp_s
    acc_ref[:, :, 1:2] += tot_s - hp_s            # hn sum
    acc_ref[:, :, 2:3] += hp_cn
    acc_ref[:, :, 3:4] += tot_c - hp_cn           # hn nonzero count

    # ---- finalize on the last column panel: one (BN, 1, 4) output tile.
    @pl.when(j == pl.num_programs(1) - 1)
    def _():
        a_hp_s = acc_ref[:, :, 0:1]
        a_hn_s = acc_ref[:, :, 1:2]
        a_hp_c = acc_ref[:, :, 2:3]
        a_hn_c = acc_ref[:, :, 3:4]
        out_ref[:, :, 0:1] = jnp.where(a_hp_c == 0.0, 0.0,
                                       a_hp_s / jnp.maximum(a_hp_c, 1.0))
        out_ref[:, :, 1:2] = jnp.where(a_hn_c == 0.0, 0.0,
                                       a_hn_s / jnp.maximum(a_hn_c, 1.0))
        out_ref[:, :, 2:3] = a_hp_c
        out_ref[:, :, 3:4] = a_hn_c


def part_contrast_loss(feature, label, pos_margin, neg_margin,
                       block_parts=None, block_cols=None):
    """Returns (hp_loss_mean, hn_loss_mean, hp_nonzero_mean, hn_nonzero_mean)."""
    n, m, d = feature.shape
    itemsize = jnp.dtype(feature.dtype).itemsize

    # Integer labels compare exactly as int32 (no 2^24 f32 concern); float
    # labels fall back to an f32 compare.
    if jnp.issubdtype(label.dtype, jnp.floating):
        lab = label.astype(jnp.float32)
    else:
        lab = label.astype(jnp.int32)

    # ------------------------- VMEM-aware tiling ----------------------------
    try:
        vmem_cap = int(pltpu.get_tpu_info().vmem_capacity_bytes)
    except Exception:                        # interpret mode / older runtimes
        vmem_cap = 128 << 20
    # ~24 MiB working budget on v5e/v6e (128 MiB VMEM), ~16 MiB on v7x (64 MiB).
    budget = min(24 << 20, vmem_cap // 4)

    ew_bytes = 24  # ~6 live f32 (m_pad, tile_j) elementwise temporaries

    def _fixed_per_part(mp):
        feat_b = 3 * mp * d * itemsize              # 2 dbuf inputs + centered scratch
        x2_b = mp * 128 * 4                         # (mp, 1) f32 scratch (lane padded)
        lab_b = 2 * mp * 128 * 4 + 2 * 8 * mp * 4   # col + row labels (dbuf)
        return feat_b + x2_b + lab_b

    if block_cols is not None:
        tj = int(block_cols)
        tj = m if tj >= m else max(128, (tj // 128) * 128)
    elif _fixed_per_part(m) + ew_bytes * m * m <= budget:
        tj = m                                       # single panel covers all columns
    else:
        tj = 128
        for cand in (1024, 512, 256, 128):
            mp = -(-m // cand) * cand
            if _fixed_per_part(mp) + ew_bytes * mp * cand <= budget:
                tj = cand
                break
    m_pad = -(-m // tj) * tj
    n_panels = m_pad // tj

    per_part = _fixed_per_part(m_pad) + ew_bytes * m_pad * tj
    if block_parts is not None:
        bn = max(1, min(int(block_parts), n))
    else:
        bn = max(1, int(budget // per_part))
        if n >= 2:
            # >= 2 part-blocks so the "parallel" axis can use both v7x TCs.
            bn = min(bn, -(-n // 2))
        bn = min(bn, n)

    n_blocks = -(-n // bn)
    n_pad = n_blocks * bn

    # ------------------------- pad + layout operands ------------------------
    feat = feature
    if m_pad != m:
        feat = jnp.pad(feat, ((0, 0), (0, m_pad - m), (0, 0)))
        lab = jnp.pad(lab, ((0, 0), (0, m_pad - m)))
    if n_pad != n:
        feat = jnp.pad(feat, ((0, n_pad - n), (0, 0), (0, 0)))
        lab = jnp.pad(lab, ((0, n_pad - n), (0, 0)))
    lab_row = lab.reshape(n_pad, 1, m_pad)           # lane-dense row labels
    lab_col = lab.reshape(n_pad, m_pad, 1)           # pre-transposed column labels

    # f32 keeps HIGHEST (Mosaic dot only supports DEFAULT/HIGHEST; dist2 is
    # cancellation prone).  bf16 feeds the MXU natively with f32 accumulation;
    # the in-kernel mean-centering bounds its cancellation error.
    if feat.dtype == jnp.float32:
        gram_precision = jax.lax.Precision.HIGHEST
    else:
        gram_precision = jax.lax.Precision.DEFAULT

    vmem_limit = int(min(vmem_cap * 3 // 4,
                         max(budget + (8 << 20), bn * per_part + (2 << 20))))

    kernel = functools.partial(
        _part_contrast_kernel,
        pos_margin=float(pos_margin),
        neg_margin=float(neg_margin),
        gram_precision=gram_precision,
        tile_j=tj, m_pad=m_pad, m_valid=m)

    stats = pl.pallas_call(
        kernel,
        out_shape=jax.ShapeDtypeStruct((n_pad, 1, 4), jnp.float32),
        grid_spec=pltpu.PrefetchScalarGridSpec(
            num_scalar_prefetch=0,
            grid=(n_blocks, n_panels),
            in_specs=[
                pl.BlockSpec((bn, m_pad, d), lambda i, j: (i, 0, 0)),
                pl.BlockSpec((bn, 1, tj), lambda i, j: (i, 0, j)),
                pl.BlockSpec((bn, m_pad, 1), lambda i, j: (i, 0, 0)),
            ],
            out_specs=pl.BlockSpec((bn, 1, 4), lambda i, j: (i, 0, 0)),
            scratch_shapes=[
                pltpu.VMEM((bn, m_pad, d), feat.dtype),   # centered features
                pltpu.VMEM((bn, m_pad, 1), jnp.float32),  # squared norms
                pltpu.VMEM((bn, 1, 4), jnp.float32),      # running stats
            ]),
        compiler_params=pltpu.CompilerParams(
            dimension_semantics=("parallel", "arbitrary"),
            vmem_limit_bytes=vmem_limit),
    )(feat, lab_row, lab_col)

    stats = jnp.mean(stats.reshape(n_pad, 4)[:n], axis=0)
    return stats[0], stats[1], stats[2], stats[3]


def _reference(feature, label, pos_margin, neg_margin):
    """Pure-JAX reference mirroring the PyTorch module (weakshot=False)."""
    feature = feature.astype(jnp.float32)
    x2 = jnp.sum(feature ** 2, axis=2)
    g = jnp.einsum('nmd,nkd->nmk', feature, feature,
                   precision=jax.lax.Precision.HIGHEST)
    dist = jnp.sqrt(jnp.maximum(x2[:, :, None] + x2[:, None, :] - 2.0 * g, 0.0))
    hp_mask = label[:, :, None] == label[:, None, :]
    hn_mask = ~hp_mask
    hp_loss = jnp.where(hp_mask, jnp.maximum(dist - pos_margin, 0.0), 0.0)
    hn_loss = jnp.where(hn_mask, jnp.maximum(neg_margin - dist, 0.0), 0.0)
    hp_cnt = jnp.sum(hp_loss > 0.0, axis=(1, 2)).astype(jnp.float32)
    hn_cnt = jnp.sum(hn_loss > 0.0, axis=(1, 2)).astype(jnp.float32)
    hp_mean = jnp.where(hp_cnt == 0.0, 0.0,
                        jnp.sum(hp_loss, axis=(1, 2)) / jnp.maximum(hp_cnt, 1.0))
    hn_mean = jnp.where(hn_cnt == 0.0, 0.0,
                        jnp.sum(hn_loss, axis=(1, 2)) / jnp.maximum(hn_cnt, 1.0))
    return (jnp.mean(hp_mean), jnp.mean(hn_mean),
            jnp.mean(hp_cnt), jnp.mean(hn_cnt))


if __name__ == "__main__":
    pos_margin, neg_margin = 0.2, 0.7
    key = jax.random.PRNGKey(0)
    k1, k2, k3, k4, k5, k6 = jax.random.split(key, 6)

    def _check(outs, refs, rtol, atol):
        for o, r in zip(outs, refs):
            assert jnp.allclose(o, r, rtol=rtol, atol=atol), (o, r)

    # Case 1: small, auto config (n=4 parts, m=8 samples, d=32 features).
    # Scale 0.05 puts distances (~0.4) between the margins so both the hp and
    # hn branches produce nonzero losses and counts.
    n, m, d = 4, 8, 32
    feature = 0.05 * jax.random.normal(k1, (n, m, d), dtype=jnp.float32)
    base_label = jnp.array([0, 0, 1, 1, 2, 2, 3, 3], dtype=jnp.int32)
    label = jnp.tile(base_label[None, :], (n, 1))
    outs = jax.block_until_ready(
        part_contrast_loss(feature, label, pos_margin, neg_margin))
    refs = jax.block_until_ready(
        _reference(feature, label, pos_margin, neg_margin))
    _check(outs, refs, 1e-4, 1e-5)

    # Case 2: multi-block grid with part padding (n=12, forced block_parts=8).
    n2 = 12
    feature2 = 0.05 * jax.random.normal(k3, (n2, m, d), dtype=jnp.float32)
    label2 = jax.random.randint(k4, (n2, m), 0, 4, dtype=jnp.int32)
    outs2 = jax.block_until_ready(
        part_contrast_loss(feature2, label2, pos_margin, neg_margin,
                           block_parts=8))
    refs2 = jax.block_until_ready(
        _reference(feature2, label2, pos_margin, neg_margin))
    _check(outs2, refs2, 1e-4, 1e-5)

    # Case 3: column-panel tiling with row/column padding (m=200, tile_j=128
    # forced -> 2 panels, m padded to 256, per-panel accumulate + finalize).
    n3, m3 = 2, 200
    feature3 = 0.05 * jax.random.normal(k5, (n3, m3, d), dtype=jnp.float32)
    label3 = jax.random.randint(k6, (n3, m3), 0, 4, dtype=jnp.int32)
    outs3 = jax.block_until_ready(
        part_contrast_loss(feature3, label3, pos_margin, neg_margin,
                           block_cols=128))
    refs3 = jax.block_until_ready(
        _reference(feature3, label3, pos_margin, neg_margin))
    _check(outs3, refs3, 3e-4, 1e-5)

    print("KERNEL_OK")
</pallas_src>

<mosaic_0001>
module attributes {stable_mosaic.version = 11 : i64} {
  func.func @_part_contrast_kernel(%arg0: i32, %arg1: i32, %arg2: memref<2x8x32xf32, #tpu.memory_space<vmem>>, %arg3: memref<2x1x8xi32, #tpu.memory_space<vmem>>, %arg4: memref<2x8x1xi32, #tpu.memory_space<vmem>>, %arg5: memref<2x1x4xf32, #tpu.memory_space<vmem>>, %arg6: memref<2x8x32xf32, #tpu.memory_space<vmem>>, %arg7: memref<2x8x1xf32, #tpu.memory_space<vmem>>, %arg8: memref<2x1x4xf32, #tpu.memory_space<vmem>>) attributes {dimension_semantics = [#tpu.dimension_semantics<parallel>, #tpu.dimension_semantics<arbitrary>], iteration_bounds = array<i64: 2, 1>, scalar_prefetch = 0 : i64, scratch_operands = 3 : i64, tpu.core_type = #tpu.core_type<tc>, window_params = [{transform_indices = @transform_0, window_bounds = array<i64: 2, 8, 32>}, {transform_indices = @transform_1, window_bounds = array<i64: 2, 1, 8>}, {transform_indices = @transform_2, window_bounds = array<i64: 2, 8, 1>}, {transform_indices = @transform_3, window_bounds = array<i64: 2, 1, 4>}]} {
    %c0_i32 = arith.constant 0 : i32
    %0 = arith.cmpi eq, %arg1, %c0_i32 : i32
    %1 = arith.extui %0 : i1 to i32
    %c0_i32_0 = arith.constant 0 : i32
    %2 = arith.cmpi ne, %1, %c0_i32_0 : i32
    scf.if %2 {
      %c0_51 = arith.constant 0 : index
      %c0_52 = arith.constant 0 : index
      %c0_53 = arith.constant 0 : index
      %69 = vector.load %arg2[%c0_51, %c0_52, %c0_53] : memref<2x8x32xf32, #tpu.memory_space<vmem>>, vector<2x8x32xf32>
      %cst_54 = arith.constant dense<0.000000e+00> : vector<2x32xf32>
      %70 = vector.multi_reduction <add>, %69, %cst_54 [1] : vector<2x8x32xf32> to vector<2x32xf32>
      %71 = vector.shape_cast %70 : vector<2x32xf32> to vector<2x1x32xf32>
      %cst_55 = arith.constant 1.250000e-01 : f32
      %72 = vector.broadcast %cst_55 : f32 to vector<2x1x32xf32>
      %73 = arith.mulf %71, %72 : vector<2x1x32xf32>
      %74 = vector.broadcast %73 : vector<2x1x32xf32> to vector<2x8x32xf32>
      %75 = arith.subf %69, %74 : vector<2x8x32xf32>
      %c0_56 = arith.constant 0 : index
      %c0_57 = arith.constant 0 : index
      %c0_58 = arith.constant 0 : index
      %76 = vector.load %arg6[%c0_56, %c0_57, %c0_58] : memref<2x8x32xf32, #tpu.memory_space<vmem>>, vector<2x8x32xf32>
      tpu.vector_store %arg6[%c0_56, %c0_57, %c0_58], %75 {strides = array<i32>} : memref<2x8x32xf32, #tpu.memory_space<vmem>>, vector<2x8x32xf32>,
      %77 = arith.mulf %75, %75 : vector<2x8x32xf32>
      %cst_59 = arith.constant dense<0.000000e+00> : vector<2x8xf32>
      %78 = vector.multi_reduction <add>, %77, %cst_59 [2] : vector<2x8x32xf32> to vector<2x8xf32>
      %79 = vector.shape_cast %78 : vector<2x8xf32> to vector<2x8x1xf32>
      %c0_60 = arith.constant 0 : index
      %c0_61 = arith.constant 0 : index
      %c0_62 = arith.constant 0 : index
      %80 = vector.load %arg7[%c0_60, %c0_61, %c0_62] : memref<2x8x1xf32, #tpu.memory_space<vmem>>, vector<2x8x1xf32>
      tpu.vector_store %arg7[%c0_60, %c0_61, %c0_62], %79 {strides = array<i32>} : memref<2x8x1xf32, #tpu.memory_space<vmem>>, vector<2x8x1xf32>,
      %cst_63 = arith.constant 0.000000e+00 : f32
      %81 = vector.broadcast %cst_63 : f32 to vector<2x1x4xf32>
      %c0_64 = arith.constant 0 : index
      %c0_65 = arith.constant 0 : index
      %c0_66 = arith.constant 0 : index
      %82 = vector.load %arg8[%c0_64, %c0_65, %c0_66] : memref<2x1x4xf32, #tpu.memory_space<vmem>>, vector<2x1x4xf32>
      tpu.vector_store %arg8[%c0_64, %c0_65, %c0_66], %81 {strides = array<i32>} : memref<2x1x4xf32, #tpu.memory_space<vmem>>, vector<2x1x4xf32>,
    } else {
    }
    %c0 = arith.constant 0 : index
    %c0_1 = arith.constant 0 : index
    %c0_2 = arith.constant 0 : index
    %3 = vector.load %arg6[%c0, %c0_1, %c0_2] : memref<2x8x32xf32, #tpu.memory_space<vmem>>, vector<2x8x32xf32>
    %c0_3 = arith.constant 0 : index
    %c0_4 = arith.constant 0 : index
    %c0_5 = arith.constant 0 : index
    %4 = vector.load %arg7[%c0_3, %c0_4, %c0_5] : memref<2x8x1xf32, #tpu.memory_space<vmem>>, vector<2x8x1xf32>
    %cst = arith.constant dense<0.000000e+00> : vector<2x8x8xf32>
    %5 = tpu.matmul %3, %3, %cst {dimension_numbers = #tpu.dot_dimension_numbers<[2], [2], [1], [1], [0, 0, 0, 1, 1, 1], [0], [0]>, precision = #tpu.contract_precision<fp32>} : vector<2x8x32xf32>, vector<2x8x32xf32>, vector<2x8x8xf32> -> vector<2x8x8xf32>
    %6 = tpu.transpose %4, [0, 2, 1] : vector<2x8x1xf32> -> vector<2x1x8xf32>
    %7 = vector.broadcast %4 : vector<2x8x1xf32> to vector<2x8x8xf32>
    %8 = vector.broadcast %6 : vector<2x1x8xf32> to vector<2x8x8xf32>
    %9 = arith.addf %7, %8 : vector<2x8x8xf32>
    %cst_6 = arith.constant 2.000000e+00 : f32
    %10 = vector.broadcast %cst_6 : f32 to vector<2x8x8xf32>
    %11 = arith.mulf %10, %5 : vector<2x8x8xf32>
    %12 = arith.subf %9, %11 : vector<2x8x8xf32>
    %cst_7 = arith.constant 0.000000e+00 : f32
    %13 = vector.broadcast %cst_7 : f32 to vector<2x8x8xf32>
    %14 = arith.maximumf %12, %13 : vector<2x8x8xf32>
    %15 = math.sqrt %14 : vector<2x8x8xf32>
    %c0_8 = arith.constant 0 : index
    %c0_9 = arith.constant 0 : index
    %c0_10 = arith.constant 0 : index
    %16 = vector.load %arg4[%c0_8, %c0_9, %c0_10] : memref<2x8x1xi32, #tpu.memory_space<vmem>>, vector<2x8x1xi32>
    %c0_11 = arith.constant 0 : index
    %c0_12 = arith.constant 0 : index
    %c0_13 = arith.constant 0 : index
    %17 = vector.load %arg3[%c0_11, %c0_12, %c0_13] : memref<2x1x8xi32, #tpu.memory_space<vmem>>, vector<2x1x8xi32>
    %18 = vector.broadcast %16 : vector<2x8x1xi32> to vector<2x8x8xi32>
    %19 = vector.broadcast %17 : vector<2x1x8xi32> to vector<2x8x8xi32>
    %20 = arith.cmpi eq, %18, %19 : vector<2x8x8xi32>
    %cst_14 = arith.constant 2.000000e-01 : f32
    %21 = vector.broadcast %cst_14 : f32 to vector<2x8x8xf32>
    %22 = arith.subf %15, %21 : vector<2x8x8xf32>
    %cst_15 = arith.constant 0.699999988 : f32
    %23 = vector.broadcast %cst_15 : f32 to vector<2x8x8xf32>
    %24 = arith.subf %23, %15 : vector<2x8x8xf32>
    %25 = arith.select %20, %22, %24 : vector<2x8x8xi1>, vector<2x8x8xf32>
    %cst_16 = arith.constant 0.000000e+00 : f32
    %26 = vector.broadcast %cst_16 : f32 to vector<2x8x8xf32>
    %27 = arith.maximumf %25, %26 : vector<2x8x8xf32>
    %cst_17 = arith.constant 0.000000e+00 : f32
    %28 = vector.broadcast %cst_17 : f32 to vector<2x8x8xf32>
    %29 = arith.cmpf ogt, %27, %28 : vector<2x8x8xf32>
    %30 = arith.extui %29 : vector<2x8x8xi1> to vector<2x8x8xi32>
    %31 = arith.sitofp %30 : vector<2x8x8xi32> to vector<2x8x8xf32>
    %cst_18 = arith.constant 0.000000e+00 : f32
    %32 = vector.broadcast %cst_18 : f32 to vector<2x8x8xf32>
    %33 = arith.select %20, %27, %32 : vector<2x8x8xi1>, vector<2x8x8xf32>
    %cst_19 = arith.constant 0.000000e+00 : f32
    %34 = vector.broadcast %cst_19 : f32 to vector<2x8x8xf32>
    %35 = arith.select %20, %31, %34 : vector<2x8x8xi1>, vector<2x8x8xf32>
    %cst_20 = arith.constant dense<0.000000e+00> : vector<2x8xf32>
    %36 = vector.multi_reduction <add>, %27, %cst_20 [2] : vector<2x8x8xf32> to vector<2x8xf32>
    %37 = vector.shape_cast %36 : vector<2x8xf32> to vector<2x8x1xf32>
    %cst_21 = arith.constant dense<0.000000e+00> : vector<2x1xf32>
    %38 = vector.multi_reduction <add>, %37, %cst_21 [1] : vector<2x8x1xf32> to vector<2x1xf32>
    %39 = vector.shape_cast %38 : vector<2x1xf32> to vector<2x1x1xf32>
    %cst_22 = arith.constant dense<0.000000e+00> : vector<2x8xf32>
    %40 = vector.multi_reduction <add>, %31, %cst_22 [2] : vector<2x8x8xf32> to vector<2x8xf32>
    %41 = vector.shape_cast %40 : vector<2x8xf32> to vector<2x8x1xf32>
    %cst_23 = arith.constant dense<0.000000e+00> : vector<2x1xf32>
    %42 = vector.multi_reduction <add>, %41, %cst_23 [1] : vector<2x8x1xf32> to vector<2x1xf32>
    %43 = vector.shape_cast %42 : vector<2x1xf32> to vector<2x1x1xf32>
    %cst_24 = arith.constant dense<0.000000e+00> : vector<2x8xf32>
    %44 = vector.multi_reduction <add>, %33, %cst_24 [2] : vector<2x8x8xf32> to vector<2x8xf32>
    %45 = vector.shape_cast %44 : vector<2x8xf32> to vector<2x8x1xf32>
    %cst_25 = arith.constant dense<0.000000e+00> : vector<2x1xf32>
    %46 = vector.multi_reduction <add>, %45, %cst_25 [1] : vector<2x8x1xf32> to vector<2x1xf32>
    %47 = vector.shape_cast %46 : vector<2x1xf32> to vector<2x1x1xf32>
    %cst_26 = arith.constant dense<0.000000e+00> : vector<2x8xf32>
    %48 = vector.multi_reduction <add>, %35, %cst_26 [2] : vector<2x8x8xf32> to vector<2x8xf32>
    %49 = vector.shape_cast %48 : vector<2x8xf32> to vector<2x8x1xf32>
    %cst_27 = arith.constant dense<0.000000e+00> : vector<2x1xf32>
    %50 = vector.multi_reduction <add>, %49, %cst_27 [1] : vector<2x8x1xf32> to vector<2x1xf32>
    %51 = vector.shape_cast %50 : vector<2x1xf32> to vector<2x1x1xf32>
    %c0_28 = arith.constant 0 : index
    %c0_29 = arith.constant 0 : index
    %c0_30 = arith.constant 0 : index
    %52 = vector.load %arg8[%c0_28, %c0_29, %c0_30] : memref<2x1x4xf32, #tpu.memory_space<vmem>>, vector<2x1x1xf32>
    %53 = arith.addf %52, %47 : vector<2x1x1xf32>
    %c0_31 = arith.constant 0 : index
    %c0_32 = arith.constant 0 : index
    %c0_33 = arith.constant 0 : index
    %54 = vector.load %arg8[%c0_31, %c0_32, %c0_33] : memref<2x1x4xf32, #tpu.memory_space<vmem>>, vector<2x1x1xf32>
    tpu.vector_store %arg8[%c0_31, %c0_32, %c0_33], %53 {strides = array<i32>} : memref<2x1x4xf32, #tpu.memory_space<vmem>>, vector<2x1x1xf32>,
    %c0_34 = arith.constant 0 : index
    %c0_35 = arith.constant 0 : index
    %c1 = arith.constant 1 : index
    %55 = vector.load %arg8[%c0_34, %c0_35, %c1] : memref<2x1x4xf32, #tpu.memory_space<vmem>>, vector<2x1x1xf32>
    %56 = arith.subf %39, %47 : vector<2x1x1xf32>
    %57 = arith.addf %55, %56 : vector<2x1x1xf32>
    %c0_36 = arith.constant 0 : index
    %c0_37 = arith.constant 0 : index
    %c1_38 = arith.constant 1 : index
    %58 = vector.load %arg8[%c0_36, %c0_37, %c1_38] : memref<2x1x4xf32, #tpu.memory_space<vmem>>, vector<2x1x1xf32>
    tpu.vector_store %arg8[%c0_36, %c0_37, %c1_38], %57 {strides = array<i32>} : memref<2x1x4xf32, #tpu.memory_space<vmem>>, vector<2x1x1xf32>,
    %c0_39 = arith.constant 0 : index
    %c0_40 = arith.constant 0 : index
    %c2 = arith.constant 2 : index
    %59 = vector.load %arg8[%c0_39, %c0_40, %c2] : memref<2x1x4xf32, #tpu.memory_space<vmem>>, vector<2x1x1xf32>
    %60 = arith.addf %59, %51 : vector<2x1x1xf32>
    %c0_41 = arith.constant 0 : index
    %c0_42 = arith.constant 0 : index
    %c2_43 = arith.constant 2 : index
    %61 = vector.load %arg8[%c0_41, %c0_42, %c2_43] : memref<2x1x4xf32, #tpu.memory_space<vmem>>, vector<2x1x1xf32>
    tpu.vector_store %arg8[%c0_41, %c0_42, %c2_43], %60 {strides = array<i32>} : memref<2x1x4xf32, #tpu.memory_space<vmem>>, vector<2x1x1xf32>,
    %c0_44 = arith.constant 0 : index
    %c0_45 = arith.constant 0 : index
    %c3 = arith.constant 3 : index
    %62 = vector.load %arg8[%c0_44, %c0_45, %c3] : memref<2x1x4xf32, #tpu.memory_space<vmem>>, vector<2x1x1xf32>
    %63 = arith.subf %43, %51 : vector<2x1x1xf32>
    %64 = arith.addf %62, %63 : vector<2x1x1xf32>
    %c0_46 = arith.constant 0 : index
    %c0_47 = arith.constant 0 : index
    %c3_48 = arith.constant 3 : index
    %65 = vector.load %arg8[%c0_46, %c0_47, %c3_48] : memref<2x1x4xf32, #tpu.memory_space<vmem>>, vector<2x1x1xf32>
    tpu.vector_store %arg8[%c0_46, %c0_47, %c3_48], %64 {strides = array<i32>} : memref<2x1x4xf32, #tpu.memory_space<vmem>>, vector<2x1x1xf32>,
    %c0_i32_49 = arith.constant 0 : i32
    %66 = arith.cmpi eq, %arg1, %c0_i32_49 : i32
    %67 = arith.extui %66 : i1 to i32
    %c0_i32_50 = arith.constant 0 : i32
    %68 = arith.cmpi ne, %67, %c0_i32_50 : i32
    scf.if %68 {
      %c0_51 = arith.constant 0 : index
      %c0_52 = arith.constant 0 : index
      %c0_53 = arith.constant 0 : index
      %69 = vector.load %arg8[%c0_51, %c0_52, %c0_53] : memref<2x1x4xf32, #tpu.memory_space<vmem>>, vector<2x1x1xf32>
      %c0_54 = arith.constant 0 : index
      %c0_55 = arith.constant 0 : index
      %c1_56 = arith.constant 1 : index
      %70 = vector.load %arg8[%c0_54, %c0_55, %c1_56] : memref<2x1x4xf32, #tpu.memory_space<vmem>>, vector<2x1x1xf32>
      %c0_57 = arith.constant 0 : index
      %c0_58 = arith.constant 0 : index
      %c2_59 = arith.constant 2 : index
      %71 = vector.load %arg8[%c0_57, %c0_58, %c2_59] : memref<2x1x4xf32, #tpu.memory_space<vmem>>, vector<2x1x1xf32>
      %c0_60 = arith.constant 0 : index
      %c0_61 = arith.constant 0 : index
      %c3_62 = arith.constant 3 : index
      %72 = vector.load %arg8[%c0_60, %c0_61, %c3_62] : memref<2x1x4xf32, #tpu.memory_space<vmem>>, vector<2x1x1xf32>
      %cst_63 = arith.constant 0.000000e+00 : f32
      %73 = vector.broadcast %cst_63 : f32 to vector<2x1x1xf32>
      %74 = arith.cmpf oeq, %71, %73 : vector<2x1x1xf32>
      %cst_64 = arith.constant 1.000000e+00 : f32
      %75 = vector.broadcast %cst_64 : f32 to vector<2x1x1xf32>
      %76 = arith.maximumf %71, %75 : vector<2x1x1xf32>
      %77 = arith.divf %69, %76 : vector<2x1x1xf32>
      %cst_65 = arith.constant 0.000000e+00 : f32
      %78 = vector.broadcast %cst_65 : f32 to vector<2x1x1xf32>
      %79 = arith.select %74, %78, %77 : vector<2x1x1xi1>, vector<2x1x1xf32>
      %c0_66 = arith.constant 0 : index
      %c0_67 = arith.constant 0 : index
      %c0_68 = arith.constant 0 : index
      %80 = vector.load %arg5[%c0_66, %c0_67, %c0_68] : memref<2x1x4xf32, #tpu.memory_space<vmem>>, vector<2x1x1xf32>
      tpu.vector_store %arg5[%c0_66, %c0_67, %c0_68], %79 {strides = array<i32>} : memref<2x1x4xf32, #tpu.memory_space<vmem>>, vector<2x1x1xf32>,
      %cst_69 = arith.constant 0.000000e+00 : f32
      %81 = vector.broadcast %cst_69 : f32 to vector<2x1x1xf32>
      %82 = arith.cmpf oeq, %72, %81 : vector<2x1x1xf32>
      %cst_70 = arith.constant 1.000000e+00 : f32
      %83 = vector.broadcast %cst_70 : f32 to vector<2x1x1xf32>
      %84 = arith.maximumf %72, %83 : vector<2x1x1xf32>
      %85 = arith.divf %70, %84 : vector<2x1x1xf32>
      %cst_71 = arith.constant 0.000000e+00 : f32
      %86 = vector.broadcast %cst_71 : f32 to vector<2x1x1xf32>
      %87 = arith.select %82, %86, %85 : vector<2x1x1xi1>, vector<2x1x1xf32>
      %c0_72 = arith.constant 0 : index
      %c0_73 = arith.constant 0 : index
      %c1_74 = arith.constant 1 : index
      %88 = vector.load %arg5[%c0_72, %c0_73, %c1_74] : memref<2x1x4xf32, #tpu.memory_space<vmem>>, vector<2x1x1xf32>
      tpu.vector_store %arg5[%c0_72, %c0_73, %c1_74], %87 {strides = array<i32>} : memref<2x1x4xf32, #tpu.memory_space<vmem>>, vector<2x1x1xf32>,
      %c0_75 = arith.constant 0 : index
      %c0_76 = arith.constant 0 : index
      %c2_77 = arith.constant 2 : index
      %89 = vector.load %arg5[%c0_75, %c0_76, %c2_77] : memref<2x1x4xf32, #tpu.memory_space<vmem>>, vector<2x1x1xf32>
      tpu.vector_store %arg5[%c0_75, %c0_76, %c2_77], %71 {strides = array<i32>} : memref<2x1x4xf32, #tpu.memory_space<vmem>>, vector<2x1x1xf32>,
      %c0_78 = arith.constant 0 : index
      %c0_79 = arith.constant 0 : index
      %c3_80 = arith.constant 3 : index
      %90 = vector.load %arg5[%c0_78, %c0_79, %c3_80] : memref<2x1x4xf32, #tpu.memory_space<vmem>>, vector<2x1x1xf32>
      tpu.vector_store %arg5[%c0_78, %c0_79, %c3_80], %72 {strides = array<i32>} : memref<2x1x4xf32, #tpu.memory_space<vmem>>, vector<2x1x1xf32>,
    } else {
    }
    return
  }
  func.func @transform_0(%arg0: i32, %arg1: i32) -> (i32, i32, i32) {
    %c0_i32 = arith.constant 0 : i32
    %c0_i32_0 = arith.constant 0 : i32
    %c0_i32_1 = arith.constant 0 : i32
    return %arg0, %c0_i32, %c0_i32_0 : i32, i32, i32
  }
  func.func @transform_1(%arg0: i32, %arg1: i32) -> (i32, i32, i32) {
    %c0_i32 = arith.constant 0 : i32
    %c0_i32_0 = arith.constant 0 : i32
    return %arg0, %c0_i32, %arg1 : i32, i32, i32
  }
  func.func @transform_2(%arg0: i32, %arg1: i32) -> (i32, i32, i32) {
    %c0_i32 = arith.constant 0 : i32
    %c0_i32_0 = arith.constant 0 : i32
    %c0_i32_1 = arith.constant 0 : i32
    return %arg0, %c0_i32, %c0_i32_0 : i32, i32, i32
  }
  func.func @transform_3(%arg0: i32, %arg1: i32) -> (i32, i32, i32) {
    %c0_i32 = arith.constant 0 : i32
    %c0_i32_0 = arith.constant 0 : i32
    %c0_i32_1 = arith.constant 0 : i32
    return %arg0, %c0_i32, %c0_i32_0 : i32, i32, i32
  }
}

</mosaic_0001>

<llo_original>
// kernel: tpu_custom_call.1
$region0: #{tpu_custom_call.1}
  #allocation0 [shape = 'u32[]', space=smem, size = 0x4, offset = 0x4, fixed_abs, tag = 'smem constant byte address 0x4 - core index']
  #allocation1 [shape = 'u32[144,128]{1,0:T(1,128)}', space=vmem, size = 0x12000, scoped, tag = 'internal scratch']
  #allocation2 [shape = 'f32[2,8,32]{2,1,0:T(8,128)}', space=vmem, size = 0x2000, scoped, tag = 'scratch operand']
  #allocation3 [shape = 'f32[2,8,1]{2,1,0:T(8,128)}', space=vmem, size = 0x2000, scoped, tag = 'scratch operand']
  #allocation4 [shape = 'f32[2,1,4]{2,1,0:T(1,128)}', space=vmem, size = 0x400, scoped, tag = 'scratch operand']
  %s0 = inlined_call_operand.vmem [shape: f32[4,8,32], index: 0, kind: input, shape index: {}]
  %s1 = inlined_call_operand.vmem [shape: s32[4,1,8], index: 1, kind: input, shape index: {}]
  %s2 = inlined_call_operand.vmem [shape: s32[4,8,1], index: 2, kind: input, shape index: {}]
  %s3 = inlined_call_operand.hbm [shape: f32[4,1,4], index: 3, kind: output, shape index: {}]
  %s4 = sld [smem:[#allocation0]]
  $region53: #{tpu_custom_call.1} parent=0
    _
  %s6 = ssub.s32 1, %s4
  %s7 = scalar_select 0, %s6, %s4
  $region1: #{tpu_custom_call.1} parent=0
    #allocation5 [shape = 'u8[2048]{0}', space=vmem, size = 0x800, scoped, tag = 'output window, operand 0']
    #allocation6 [shape = 's32[2]{0}', space=sflag, size = 0x8, scoped, tag = 'scoped memory for tpu_custom_call.1']
    %8 = vsyncpa [#allocation6], 0
    %s9 = scalar_lea.sflag [#allocation6], 1
    %10 = vsyncpa %s9, 0
    loop: start=0, step=1, limit=4
    $region2: #{tpu_custom_call.1} parent=1 // loop_pre_header
      _
    $region3: #{tpu_custom_call.1} parent=1 // loop_header
      %s12 = sphi 0, %s16
      %p13 = scmp.ge.s32.totalorder %s12, 4
      %s19 = sphi 0, %s31
      %s20 = sphi 0, %s27
      %s21 = sphi 0, %s19
      %s22 = sphi 0, %s20
      %s23 = sphi 0, %s21
      %s24 = sphi 0, %s22
      %s34 = sphi 0, %s36
      %s37 = sphi 0, %s34
      %s38 = sphi 0, %s37
      %s54 = sphi 0, %s38
      %s62 = sphi 0, %s64
      %s65 = sphi 0, %s62
      %s66 = sphi 0, %s65
      %s82 = sphi 0, %s66
      %s88 = sphi 0, %s90
      %s91 = sphi 0, %s88
      %s92 = sphi 0, %s91
      %s108 = sphi 0, %s92
      %s114 = sphi 0, %s116
      %s117 = sphi 0, %s114
      %s118 = sphi 0, %s117
      %s134 = sphi 0, %s118
    $region4: #{tpu_custom_call.1} parent=1 // loop_header_branch
      %15 = sbr.rel (%p13) target = $region8
    $region5: #{tpu_custom_call.1} parent=1 // loop_body
      %s17 = ssub.s32 %s12, 1
      %s18 = ssub.s32 %s12, 2
      %s25 = sadd.s32 1, %s20
      %p26 = scmp.ge.s32.totalorder %s25, 1
      %s27 = scalar_select %p26, 0, %s25
      %s28 = sadd.s32 1, %s19
      %s29 = scalar_select %p26, %s28, %s19
      %p30 = scmp.ge.s32.totalorder %s29, 2
      %s31 = scalar_select %p30, 0, %s29
      %s32 = ssub.s32 %s19, %s31
      %p33 = scmp.eq.s32.totalorder %s32, 0
      %s35 = sadd.s32 %s34, 1
      %s36 = scalar_select %p33, %s34, %s35
      %p39 = pneg %p33
      %p40 = scmp.eq.s32.totalorder %s12, 1
      %p41 = por %p39, %p40
      %p42 = scmp.ne.s32.totalorder %s34, %s37
      %p43 = scmp.eq.s32.totalorder %s12, 0
      %p44 = por %p42, %p43
      %p45 = scmp.ne.s32.totalorder %s34, %s37
      %p46 = scmp.eq.s32.totalorder %s17, 1
      %p47 = por %p45, %p46
      %p48 = scmp.ne.s32.totalorder %s37, %s38
      %p49 = scmp.eq.s32.totalorder %s17, 0
      %p50 = por %p48, %p49
      %p51 = scmp.ne.s32.totalorder %s37, %s38
      %p52 = scmp.eq.s32.totalorder %s18, 1
      %p53 = por %p51, %p52
      %p55 = scmp.ne.s32.totalorder %s38, %s54
      %p56 = scmp.eq.s32.totalorder %s18, 0
      %p57 = por %p55, %p56
      %s58 = ssub.s32 %s19, %s31
      %s59 = ssub.s32 %s20, %s27
      %s60 = sor.u32 %s58, %s59
      %p61 = scmp.eq.s32.totalorder %s60, 0
      %s63 = sadd.s32 %s62, 1
      %s64 = scalar_select %p61, %s62, %s63
      %p67 = pneg %p61
      %p68 = scmp.eq.s32.totalorder %s12, 1
      %p69 = por %p67, %p68
      %p70 = scmp.ne.s32.totalorder %s62, %s65
      %p71 = scmp.eq.s32.totalorder %s12, 0
      %p72 = por %p70, %p71
      %p73 = scmp.ne.s32.totalorder %s62, %s65
      %p74 = scmp.eq.s32.totalorder %s17, 1
      %p75 = por %p73, %p74
      %p76 = scmp.ne.s32.totalorder %s65, %s66
      %p77 = scmp.eq.s32.totalorder %s17, 0
      %p78 = por %p76, %p77
      %p79 = scmp.ne.s32.totalorder %s65, %s66
      %p80 = scmp.eq.s32.totalorder %s18, 1
      %p81 = por %p79, %p80
      %p83 = scmp.ne.s32.totalorder %s66, %s82
      %p84 = scmp.eq.s32.totalorder %s18, 0
      %p85 = por %p83, %p84
      %s86 = ssub.s32 %s19, %s31
      %p87 = scmp.eq.s32.totalorder %s86, 0
      %s89 = sadd.s32 %s88, 1
      %s90 = scalar_select %p87, %s88, %s89
      %p93 = pneg %p87
      %p94 = scmp.eq.s32.totalorder %s12, 1
      %p95 = por %p93, %p94
      %p96 = scmp.ne.s32.totalorder %s88, %s91
      %p97 = scmp.eq.s32.totalorder %s12, 0
      %p98 = por %p96, %p97
      %p99 = scmp.ne.s32.totalorder %s88, %s91
      %p100 = scmp.eq.s32.totalorder %s17, 1
      %p101 = por %p99, %p100
      %p102 = scmp.ne.s32.totalorder %s91, %s92
      %p103 = scmp.eq.s32.totalorder %s17, 0
      %p104 = por %p102, %p103
      %p105 = scmp.ne.s32.totalorder %s91, %s92
      %p106 = scmp.eq.s32.totalorder %s18, 1
      %p107 = por %p105, %p106
      %p109 = scmp.ne.s32.totalorder %s92, %s108
      %p110 = scmp.eq.s32.totalorder %s18, 0
      %p111 = por %p109, %p110
      %s112 = ssub.s32 %s19, %s31
      %p113 = scmp.eq.s32.totalorder %s112, 0
      %s115 = sadd.s32 %s114, 1
      %s116 = scalar_select %p113, %s114, %s115
      %p119 = pneg %p113
      %p120 = scmp.eq.s32.totalorder %s12, 1
      %p121 = por %p119, %p120
      %p122 = scmp.ne.s32.totalorder %s114, %s117
      %p123 = scmp.eq.s32.totalorder %s12, 0
      %p124 = por %p122, %p123
      %p125 = scmp.ne.s32.totalorder %s114, %s117
      %p126 = scmp.eq.s32.totalorder %s17, 1
      %p127 = por %p125, %p126
      %p128 = scmp.ne.s32.totalorder %s117, %s118
      %p129 = scmp.eq.s32.totalorder %s17, 0
      %p130 = por %p128, %p129
      %p131 = scmp.ne.s32.totalorder %s117, %s118
      %p132 = scmp.eq.s32.totalorder %s18, 1
      %p133 = por %p131, %p132
      %p135 = scmp.ne.s32.totalorder %s118, %s134
      %p136 = scmp.eq.s32.totalorder %s18, 0
      %p137 = por %p135, %p136
      %p138 = scmp.le.s32.totalorder 1, %s12
      %p139 = scmp.lt.s32.totalorder %s12, 3
      %p140 = pnand %p138, %p139
      %p141 = pneg %p140
      // Predicated region
      $region9: #{tpu_custom_call.1} parent=5 // pred_check
        _
      $region10: #{tpu_custom_call.1} parent=5 // pred_check_branch
        %143 = sbr.rel (%p140) target = $region12
      $region11: #{tpu_custom_call.1} parent=5 // pred_region
        %s144 = ssub.s32 %s12, 1
      $region12: #{tpu_custom_call.1} parent=5 // pred_fallthru
        _
      %p145 = scmp.lt.s32.totalorder %s12, 2
      // Predicated region
      $region13: #{tpu_custom_call.1} parent=5 // pred_check
        %p146 = pneg %p145
      $region14: #{tpu_custom_call.1} parent=5 // pred_check_branch
        %148 = sbr.rel (%p146) target = $region16
      $region15: #{tpu_custom_call.1} parent=5 // pred_region
        // Predicated region
        $region17: #{tpu_custom_call.1} parent=15 // pred_check
          %p149 = pneg %p44
        $region18: #{tpu_custom_call.1} parent=15 // pred_check_branch
          %151 = sbr.rel (%p149) target = $region20
        $region19: #{tpu_custom_call.1} parent=15 // pred_region
          %s152 = smul.u32 2, %s19
          %p153 = scmp.lt.s32.totalorder %s152, 3
          %s154 = scalar_select %p153, %s152, 3
          %s155 = smul.addr %s154, 8
          %s156 = scalar_lea.vmem %s0, %s155
          %s157 = smul.u32 2, %s19
        $region20: #{tpu_custom_call.1} parent=15 // pred_fallthru
          _
        // Predicated region
        $region21: #{tpu_custom_call.1} parent=15 // pred_check
          %p158 = pneg %p72
        $region22: #{tpu_custom_call.1} parent=15 // pred_check_branch
          %160 = sbr.rel (%p158) target = $region24
        $region23: #{tpu_custom_call.1} parent=15 // pred_region
          %s161 = smul.u32 2, %s19
          %p162 = scmp.lt.s32.totalorder %s161, 3
          %s163 = scalar_select %p162, %s161, 3
          %p164 = scmp.lt.s32.totalorder %s20, 0
          %s165 = scalar_select %p164, %s20, 0
          %s166 = sadd.s32 %s165, %s163
          %s167 = scalar_lea.vmem %s1, %s166
          %s168 = smul.u32 2, %s19
        $region24: #{tpu_custom_call.1} parent=15 // pred_fallthru
          _
        // Predicated region
        $region25: #{tpu_custom_call.1} parent=15 // pred_check
          %p169 = pneg %p98
        $region26: #{tpu_custom_call.1} parent=15 // pred_check_branch
          %171 = sbr.rel (%p169) target = $region28
        $region27: #{tpu_custom_call.1} parent=15 // pred_region
          %s172 = smul.u32 2, %s19
          %p173 = scmp.lt.s32.totalorder %s172, 3
          %s174 = scalar_select %p173, %s172, 3
          %s175 = smul.addr %s174, 8
          %s176 = scalar_lea.vmem %s2, %s175
          %s177 = smul.u32 2, %s19
        $region28: #{tpu_custom_call.1} parent=15 // pred_fallthru
          _
      $region16: #{tpu_custom_call.1} parent=5 // pred_fallthru
        _
      %p178 = scmp.le.s32.totalorder 1, %s12
      %p179 = scmp.lt.s32.totalorder %s12, 3
      %p180 = pnand %p178, %p179
      %p181 = pneg %p180
      // Predicated region
      $region29: #{tpu_custom_call.1} parent=5 // pred_check
        _
      $region30: #{tpu_custom_call.1} parent=5 // pred_check_branch
        %183 = sbr.rel (%p180) target = $region32
      $region31: #{tpu_custom_call.1} parent=5 // pred_region
        %s184 = ssub.s32 %s12, 1
        %s185 = smul.u32 2, %s21
        %p186 = scmp.lt.s32.totalorder %s185, 3
        %s187 = scalar_select %p186, %s185, 3
        %s188 = smul.addr %s187, 8
        %s189 = scalar_lea.vmem %s0, %s188
        %p190 = pneg %p50
        %p191 = pneg %p47
        %s192 = smul.u32 2, %s21
        %p193 = scmp.lt.s32.totalorder %s192, 3
        %s194 = scalar_select %p193, %s192, 3
        %p195 = scmp.lt.s32.totalorder %s22, 0
        %s196 = scalar_select %p195, %s22, 0
        %s197 = sadd.s32 %s196, %s194
        %s198 = scalar_lea.vmem %s1, %s197
        %p199 = pneg %p78
        %p200 = pneg %p75
        %s201 = smul.u32 2, %s21
        %p202 = scmp.lt.s32.totalorder %s201, 3
        %s203 = scalar_select %p202, %s201, 3
        %s204 = smul.addr %s203, 8
        %s205 = scalar_lea.vmem %s2, %s204
        %p206 = pneg %p104
        %p207 = pneg %p101
        %p208 = pneg %p130
        %p209 = pneg %p127
        %s210 = sand.u32 %s117, 1
        %s211 = scalar_lea.sflag [#allocation6], %s210
        %s212 = sand.u32 %s117, 1
        %s213 = smul.addr %s212, 2
        %s214 = scalar_lea.vmem [#allocation5], %s213
        %s215 = smul.u32 2, %s21
        %p216 = scmp.lt.s32.totalorder %s215, 3
        %s217 = scalar_select %p216, %s215, 3
        %s218 = smul.addr %s217, 8
        %s219 = scalar_lea.vmem %s0, %s218
        %s220 = smul.u32 2, %s21
        %s221 = smul.u32 2, %s21
        %p222 = scmp.lt.s32.totalorder %s221, 3
        %s223 = scalar_select %p222, %s221, 3
        %p224 = scmp.lt.s32.totalorder %s22, 0
        %s225 = scalar_select %p224, %s22, 0
        %s226 = sadd.s32 %s225, %s223
        %s227 = scalar_lea.vmem %s1, %s226
        %s228 = smul.u32 2, %s21
        %s229 = smul.u32 2, %s21
        %p230 = scmp.lt.s32.totalorder %s229, 3
        %s231 = scalar_select %p230, %s229, 3
        %s232 = smul.addr %s231, 8
        %s233 = scalar_lea.vmem %s2, %s232
        %s234 = smul.u32 2, %s21
        %s235 = smul.u32 2, %s21
        %p236 = scmp.eq.s32.totalorder %s22, 0
        // Predicated region
        $region33: #{tpu_custom_call.1} parent=31 // pred_check
          %p237 = pneg %p236
        $region34: #{tpu_custom_call.1} parent=31 // pred_check_branch
          %239 = sbr.rel (%p237) target = $region36
        $region35: #{tpu_custom_call.1} parent=31 // pred_region
          %v240 = vld [vmem:[%s219] sm:$0xff]
          %v241 = vld [vmem:[%s219 + $0x8] sm:$0xff]
          %vm242 = vcmask 261120
          %v243 = vsel %vm242, %v240, 0.0
          %v244 = vrot.slane %v243, 4
          %v245 = vadd.f32 %v243, %v244
          %v246 = vrot.slane %v245, 2
          %v247 = vadd.f32 %v245, %v246
          %v248 = vrot.slane %v247, 1
          %v249 = vadd.f32 %v247, %v248
          %v250 = vsel %vm242, %v241, 0.0
          %v251 = vrot.slane %v250, 4
          %v252 = vadd.f32 %v250, %v251
          %v253 = vrot.slane %v252, 2
          %v254 = vadd.f32 %v252, %v253
          %v255 = vrot.slane %v254, 1
          %v256 = vadd.f32 %v254, %v255
          %v257 = vmul.f32 %v249, 0.125
          %v258 = vmul.f32 %v256, 0.125
          %v259 = vsub.f32 %v240, %v257
          %v260 = vsub.f32 %v241, %v258
          %261 = vst.msk [vmem:[#allocation2] sm:$0xff] %vm242, %v259
          %262 = vst.msk [vmem:[#allocation2 + $0x8] sm:$0xff] %vm242, %v260
          %v263 = vmul.f32 %v259, %v259
          %v264 = vmul.f32 %v260, %v260
          %v265 = vsel %vm242, %v263, 0.0
          %266 = vadd.xlane.f32.xlu0 %v265
          %v267 = vpop.xlane.xlu0 %266
          %v268 = vsel %vm242, %v264, 0.0
          %269 = vadd.xlane.f32.xlu0 %v268
          %v270 = vpop.xlane.xlu0 %269
          %vm271 = vcmask 7168
          %272 = vst.msk [vmem:[#allocation3] sm:$0xff] %vm271, %v267
          %273 = vst.msk [vmem:[#allocation3 + $0x8] sm:$0xff] %vm271, %v270
          %vm274 = vcmask 24576
          %275 = vst.msk [vmem:[#allocation4] sm:$0x1] %vm274, 0.0
          %276 = vst.msk [vmem:[#allocation4 + $0x1] sm:$0x1] %vm274, 0.0
        $region36: #{tpu_custom_call.1} parent=31 // pred_fallthru
          _
        %v277 = vld [vmem:[#allocation2] sm:$0xff]
        %v278 = vld [vmem:[#allocation2 + $0x8] sm:$0xff]
        %v279 = vld [vmem:[#allocation3] sm:$0xff]
        %v280 = vld [vmem:[#allocation3 + $0x8] sm:$0xff]
        %vm281 = vcmask 261120
        %v283 = vsel %vm281, %v277, 0
        %285 = vmatprep.subr.mxu0 0.0
        %286 = vmatpush1.xpose.msra.mxu0 0.0
        %287 = vmatprep.subr.mxu0 0.0
        %288 = vmatpush1.xpose.msra.mxu0 0.0
        %289 = vmatprep.subr.mxu0 0.0
        %290 = vmatpush1.xpose.msra.mxu0 0.0
        %291 = vmatprep.subr.mxu0 0.0
        %292 = vmatpush1.xpose.msra.mxu0 0.0
        %293 = vmatprep.subr.mxu0 0.0
        %294 = vmatpush1.xpose.msra.mxu0 0.0
        %295 = vmatprep.subr.mxu0 0.0
        %296 = vmatpush1.xpose.msra.mxu0 0.0
        %297 = vmatprep.subr.mxu0 0.0
        %298 = vmatpush1.xpose.msra.mxu0 0.0
        %299 = vmatprep.subr.mxu0 0.0
        %300 = vmatpush1.xpose.msra.mxu0 0.0
        %301 = vmatprep.subr.mxu0 0.0
        %302 = vmatpush1.xpose.msra.mxu0 0.0
        %303 = vmatprep.subr.mxu0 0.0
        %304 = vmatpush1.xpose.msra.mxu0 0.0
        %305 = vmatprep.subr.mxu0 0.0
        %306 = vmatpush1.xpose.msra.mxu0 0.0
        %307 = vmatprep.subr.mxu0 0.0
        %308 = vmatpush1.xpose.msra.mxu0 0.0
        %309 = vmatprep.subr.mxu0 0.0
        %310 = vmatpush1.xpose.msra.mxu0 0.0
        %311 = vmatprep.subr.mxu0 0.0
        %312 = vmatpush1.xpose.msra.mxu0 0.0
        %313 = vmatprep.subr.mxu0 0.0
        %314 = vmatpush1.xpose.msra.mxu0 0.0
        %315 = vmatprep.subr.mxu0 0.0
        %v316 = vand.u32 %v283, 4294901760
        %317 = vmatpush1.xpose.msra.mxu0 %v316
        %318 = vmatprep.subr.mxu0 0.0
        %319 = vmatpush2.xpose.msra.mxu0 0.0
        %320 = vmatprep.subr.mxu0 0.0
        %321 = vmatpush2.xpose.msra.mxu0 0.0
        %322 = vmatprep.subr.mxu0 0.0
        %323 = vmatpush2.xpose.msra.mxu0 0.0
        %324 = vmatprep.subr.mxu0 0.0
        %325 = vmatpush2.xpose.msra.mxu0 0.0
        %326 = vmatprep.subr.mxu0 0.0
        %327 = vmatpush2.xpose.msra.mxu0 0.0
        %328 = vmatprep.subr.mxu0 0.0
        %329 = vmatpush2.xpose.msra.mxu0 0.0
        %330 = vmatprep.subr.mxu0 0.0
        %331 = vmatpush2.xpose.msra.mxu0 0.0
        %332 = vmatprep.subr.mxu0 0.0
        %333 = vmatpush2.xpose.msra.mxu0 0.0
        %334 = vmatprep.subr.mxu0 0.0
        %335 = vmatpush2.xpose.msra.mxu0 0.0
        %336 = vmatprep.subr.mxu0 0.0
        %337 = vmatpush2.xpose.msra.mxu0 0.0
        %338 = vmatprep.subr.mxu0 0.0
        %339 = vmatpush2.xpose.msra.mxu0 0.0
        %340 = vmatprep.subr.mxu0 0.0
        %341 = vmatpush2.xpose.msra.mxu0 0.0
        %342 = vmatprep.subr.mxu0 0.0
        %343 = vmatpush2.xpose.msra.mxu0 0.0
        %344 = vmatprep.subr.mxu0 0.0
        %345 = vmatpush2.xpose.msra.mxu0 0.0
        %346 = vmatprep.subr.mxu0 0.0
        %347 = vmatpush2.xpose.msra.mxu0 0.0
        %348 = vmatprep.subr.mxu0 0.0
        %349 = vmatpush2.xpose.msra.mxu0 0.0
        %350 = vmatprep.mubr.f32.mxu0 0.0
        %v351 = vand.u32 %v283, 4294901760
        %v352 = vsub.f32 %v283, %v351
        %v353 = vand.u32 %v352, 4294901760
        %v354 = vsub.f32 %v352, %v353
        %v355 = vand.u32 %v354, 4294901760
        %356 = vmatmul.mubr.f32.gmra.mxu0 %v355
        %v357 = vpop.f32.mrf.mxu0
        %v358 = vadd.f32 0.0, %v357
        %v359 = vpop.f32.mrf.mxu0
        %360 = vdwg.mxu0
        %361 = vmatprep.subr.mxu0 0.0
        %362 = vmatpush1.xpose.msra.mxu0 0.0
        %363 = vmatprep.subr.mxu0 0.0
        %364 = vmatpush1.xpose.msra.mxu0 0.0
        %365 = vmatprep.subr.mxu0 0.0
        %366 = vmatpush1.xpose.msra.mxu0 0.0
        %367 = vmatprep.subr.mxu0 0.0
        %368 = vmatpush1.xpose.msra.mxu0 0.0
        %369 = vmatprep.subr.mxu0 0.0
        %370 = vmatpush1.xpose.msra.mxu0 0.0
        %371 = vmatprep.subr.mxu0 0.0
        %372 = vmatpush1.xpose.msra.mxu0 0.0
        %373 = vmatprep.subr.mxu0 0.0
        %374 = vmatpush1.xpose.msra.mxu0 0.0
        %375 = vmatprep.subr.mxu0 0.0
        %376 = vmatpush1.xpose.msra.mxu0 0.0
        %377 = vmatprep.subr.mxu0 0.0
        %378 = vmatpush1.xpose.msra.mxu0 0.0
        %379 = vmatprep.subr.mxu0 0.0
        %380 = vmatpush1.xpose.msra.mxu0 0.0
        %381 = vmatprep.subr.mxu0 0.0
        %382 = vmatpush1.xpose.msra.mxu0 0.0
        %383 = vmatprep.subr.mxu0 0.0
        %384 = vmatpush1.xpose.msra.mxu0 0.0
        %385 = vmatprep.subr.mxu0 0.0
        %386 = vmatpush1.xpose.msra.mxu0 0.0
        %387 = vmatprep.subr.mxu0 0.0
        %388 = vmatpush1.xpose.msra.mxu0 0.0
        %389 = vmatprep.subr.mxu0 0.0
        %390 = vmatpush1.xpose.msra.mxu0 0.0
        %391 = vmatprep.subr.mxu0 0.0
        %v392 = vand.u32 %v283, 4294901760
        %v393 = vsub.f32 %v283, %v392
        %v394 = vand.u32 %v393, 4294901760
        %v395 = vsub.f32 %v393, %v394
        %v396 = vand.u32 %v395, 4294901760
        %397 = vmatpush1.xpose.msra.mxu0 %v396
        %398 = vmatprep.subr.mxu0 0.0
        %399 = vmatpush2.xpose.msra.mxu0 0.0
        %400 = vmatprep.subr.mxu0 0.0
        %401 = vmatpush2.xpose.msra.mxu0 0.0
        %402 = vmatprep.subr.mxu0 0.0
        %403 = vmatpush2.xpose.msra.mxu0 0.0
        %404 = vmatprep.subr.mxu0 0.0
        %405 = vmatpush2.xpose.msra.mxu0 0.0
        %406 = vmatprep.subr.mxu0 0.0
        %407 = vmatpush2.xpose.msra.mxu0 0.0
        %408 = vmatprep.subr.mxu0 0.0
        %409 = vmatpush2.xpose.msra.mxu0 0.0
        %410 = vmatprep.subr.mxu0 0.0
        %411 = vmatpush2.xpose.msra.mxu0 0.0
        %412 = vmatprep.subr.mxu0 0.0
        %413 = vmatpush2.xpose.msra.mxu0 0.0
        %414 = vmatprep.subr.mxu0 0.0
        %415 = vmatpush2.xpose.msra.mxu0 0.0
        %416 = vmatprep.subr.mxu0 0.0
        %417 = vmatpush2.xpose.msra.mxu0 0.0
        %418 = vmatprep.subr.mxu0 0.0
        %419 = vmatpush2.xpose.msra.mxu0 0.0
        %420 = vmatprep.subr.mxu0 0.0
        %421 = vmatpush2.xpose.msra.mxu0 0.0
        %422 = vmatprep.subr.mxu0 0.0
        %423 = vmatpush2.xpose.msra.mxu0 0.0
        %424 = vmatprep.subr.mxu0 0.0
        %425 = vmatpush2.xpose.msra.mxu0 0.0
        %426 = vmatprep.subr.mxu0 0.0
        %427 = vmatpush2.xpose.msra.mxu0 0.0
        %428 = vmatprep.subr.mxu0 0.0
        %429 = vmatpush2.xpose.msra.mxu0 0.0
        %430 = vmatprep.mubr.f32.mxu0 0.0
        %v431 = vand.u32 %v283, 4294901760
        %432 = vmatmul.mubr.f32.gmra.mxu0 %v431
        %v433 = vpop.f32.mrf.mxu0
        %v434 = vadd.f32 %v358, %v433
        %v435 = vpop.f32.mrf.mxu0
        %436 = vdwg.mxu0
        %437 = vmatprep.subr.mxu0 0.0
        %438 = vmatpush1.xpose.msra.mxu0 0.0
        %439 = vmatprep.subr.mxu0 0.0
        %440 = vmatpush1.xpose.msra.mxu0 0.0
        %441 = vmatprep.subr.mxu0 0.0
        %442 = vmatpush1.xpose.msra.mxu0 0.0
        %443 = vmatprep.subr.mxu0 0.0
        %444 = vmatpush1.xpose.msra.mxu0 0.0
        %445 = vmatprep.subr.mxu0 0.0
        %446 = vmatpush1.xpose.msra.mxu0 0.0
        %447 = vmatprep.subr.mxu0 0.0
        %448 = vmatpush1.xpose.msra.mxu0 0.0
        %449 = vmatprep.subr.mxu0 0.0
        %450 = vmatpush1.xpose.msra.mxu0 0.0
        %451 = vmatprep.subr.mxu0 0.0
        %452 = vmatpush1.xpose.msra.mxu0 0.0
        %453 = vmatprep.subr.mxu0 0.0
        %454 = vmatpush1.xpose.msra.mxu0 0.0
        %455 = vmatprep.subr.mxu0 0.0
        %456 = vmatpush1.xpose.msra.mxu0 0.0
        %457 = vmatprep.subr.mxu0 0.0
        %458 = vmatpush1.xpose.msra.mxu0 0.0
        %459 = vmatprep.subr.mxu0 0.0
        %460 = vmatpush1.xpose.msra.mxu0 0.0
        %461 = vmatprep.subr.mxu0 0.0
        %462 = vmatpush1.xpose.msra.mxu0 0.0
        %463 = vmatprep.subr.mxu0 0.0
        %464 = vmatpush1.xpose.msra.mxu0 0.0
        %465 = vmatprep.subr.mxu0 0.0
        %466 = vmatpush1.xpose.msra.mxu0 0.0
        %467 = vmatprep.subr.mxu0 0.0
        %v468 = vand.u32 %v283, 4294901760
        %v469 = vsub.f32 %v283, %v468
        %470 = vmatpush1.xpose.msra.mxu0 %v469
        %471 = vmatprep.subr.mxu0 0.0
        %472 = vmatpush2.xpose.msra.mxu0 0.0
        %473 = vmatprep.subr.mxu0 0.0
        %474 = vmatpush2.xpose.msra.mxu0 0.0
        %475 = vmatprep.subr.mxu0 0.0
        %476 = vmatpush2.xpose.msra.mxu0 0.0
        %477 = vmatprep.subr.mxu0 0.0
        %478 = vmatpush2.xpose.msra.mxu0 0.0
        %479 = vmatprep.subr.mxu0 0.0
        %480 = vmatpush2.xpose.msra.mxu0 0.0
        %481 = vmatprep.subr.mxu0 0.0
        %482 = vmatpush2.xpose.msra.mxu0 0.0
        %483 = vmatprep.subr.mxu0 0.0
        %484 = vmatpush2.xpose.msra.mxu0 0.0
        %485 = vmatprep.subr.mxu0 0.0
        %486 = vmatpush2.xpose.msra.mxu0 0.0
        %487 = vmatprep.subr.mxu0 0.0
        %488 = vmatpush2.xpose.msra.mxu0 0.0
        %489 = vmatprep.subr.mxu0 0.0
        %490 = vmatpush2.xpose.msra.mxu0 0.0
        %491 = vmatprep.subr.mxu0 0.0
        %492 = vmatpush2.xpose.msra.mxu0 0.0
        %493 = vmatprep.subr.mxu0 0.0
        %494 = vmatpush2.xpose.msra.mxu0 0.0
        %495 = vmatprep.subr.mxu0 0.0
        %496 = vmatpush2.xpose.msra.mxu0 0.0
        %497 = vmatprep.subr.mxu0 0.0
        %498 = vmatpush2.xpose.msra.mxu0 0.0
        %499 = vmatprep.subr.mxu0 0.0
        %500 = vmatpush2.xpose.msra.mxu0 0.0
        %501 = vmatprep.subr.mxu0 0.0
        %502 = vmatpush2.xpose.msra.mxu0 0.0
        %503 = vmatprep.mubr.f32.mxu0 0.0
        %v504 = vand.u32 %v283, 4294901760
        %v505 = vsub.f32 %v283, %v504
        %506 = vmatmul.mubr.f32.gmra.mxu0 %v505
        %v507 = vpop.f32.mrf.mxu0
        %v508 = vadd.f32 %v434, %v507
        %v509 = vpop.f32.mrf.mxu0
        %510 = vdwg.mxu0
        %511 = vmatprep.subr.mxu0 0.0
        %512 = vmatpush1.xpose.msra.mxu0 0.0
        %513 = vmatprep.subr.mxu0 0.0
        %514 = vmatpush1.xpose.msra.mxu0 0.0
        %515 = vmatprep.subr.mxu0 0.0
        %516 = vmatpush1.xpose.msra.mxu0 0.0
        %517 = vmatprep.subr.mxu0 0.0
        %518 = vmatpush1.xpose.msra.mxu0 0.0
        %519 = vmatprep.subr.mxu0 0.0
        %520 = vmatpush1.xpose.msra.mxu0 0.0
        %521 = vmatprep.subr.mxu0 0.0
        %522 = vmatpush1.xpose.msra.mxu0 0.0
        %523 = vmatprep.subr.mxu0 0.0
        %524 = vmatpush1.xpose.msra.mxu0 0.0
        %525 = vmatprep.subr.mxu0 0.0
        %526 = vmatpush1.xpose.msra.mxu0 0.0
        %527 = vmatprep.subr.mxu0 0.0
        %528 = vmatpush1.xpose.msra.mxu0 0.0
        %529 = vmatprep.subr.mxu0 0.0
        %530 = vmatpush1.xpose.msra.mxu0 0.0
        %531 = vmatprep.subr.mxu0 0.0
        %532 = vmatpush1.xpose.msra.mxu0 0.0
        %533 = vmatprep.subr.mxu0 0.0
        %534 = vmatpush1.xpose.msra.mxu0 0.0
        %535 = vmatprep.subr.mxu0 0.0
        %536 = vmatpush1.xpose.msra.mxu0 0.0
        %537 = vmatprep.subr.mxu0 0.0
        %538 = vmatpush1.xpose.msra.mxu0 0.0
        %539 = vmatprep.subr.mxu0 0.0
        %540 = vmatpush1.xpose.msra.mxu0 0.0
        %541 = vmatprep.subr.mxu0 0.0
        %v542 = vand.u32 %v283, 4294901760
        %543 = vmatpush1.xpose.msra.mxu0 %v542
        %544 = vmatprep.subr.mxu0 0.0
        %545 = vmatpush2.xpose.msra.mxu0 0.0
        %546 = vmatprep.subr.mxu0 0.0
        %547 = vmatpush2.xpose.msra.mxu0 0.0
        %548 = vmatprep.subr.mxu0 0.0
        %549 = vmatpush2.xpose.msra.mxu0 0.0
        %550 = vmatprep.subr.mxu0 0.0
        %551 = vmatpush2.xpose.msra.mxu0 0.0
        %552 = vmatprep.subr.mxu0 0.0
        %553 = vmatpush2.xpose.msra.mxu0 0.0
        %554 = vmatprep.subr.mxu0 0.0
        %555 = vmatpush2.xpose.msra.mxu0 0.0
        %556 = vmatprep.subr.mxu0 0.0
        %557 = vmatpush2.xpose.msra.mxu0 0.0
        %558 = vmatprep.subr.mxu0 0.0
        %559 = vmatpush2.xpose.msra.mxu0 0.0
        %560 = vmatprep.subr.mxu0 0.0
        %561 = vmatpush2.xpose.msra.mxu0 0.0
        %562 = vmatprep.subr.mxu0 0.0
        %563 = vmatpush2.xpose.msra.mxu0 0.0
        %564 = vmatprep.subr.mxu0 0.0
        %565 = vmatpush2.xpose.msra.mxu0 0.0
        %566 = vmatprep.subr.mxu0 0.0
        %567 = vmatpush2.xpose.msra.mxu0 0.0
        %568 = vmatprep.subr.mxu0 0.0
        %569 = vmatpush2.xpose.msra.mxu0 0.0
        %570 = vmatprep.subr.mxu0 0.0
        %571 = vmatpush2.xpose.msra.mxu0 0.0
        %572 = vmatprep.subr.mxu0 0.0
        %573 = vmatpush2.xpose.msra.mxu0 0.0
        %574 = vmatprep.subr.mxu0 0.0
        %575 = vmatpush2.xpose.msra.mxu0 0.0
        %576 = vmatprep.mubr.f32.mxu0 0.0
        %v577 = vand.u32 %v283, 4294901760
        %v578 = vsub.f32 %v283, %v577
        %v579 = vand.u32 %v578, 4294901760
        %580 = vmatmul.mubr.f32.gmra.mxu0 %v579
        %v581 = vpop.f32.mrf.mxu0
        %v582 = vadd.f32 %v508, %v581
        %v583 = vpop.f32.mrf.mxu0
        %584 = vdwg.mxu0
        %585 = vmatprep.subr.mxu0 0.0
        %586 = vmatpush1.xpose.msra.mxu0 0.0
        %587 = vmatprep.subr.mxu0 0.0
        %588 = vmatpush1.xpose.msra.mxu0 0.0
        %589 = vmatprep.subr.mxu0 0.0
        %590 = vmatpush1.xpose.msra.mxu0 0.0
        %591 = vmatprep.subr.mxu0 0.0
        %592 = vmatpush1.xpose.msra.mxu0 0.0
        %593 = vmatprep.subr.mxu0 0.0
        %594 = vmatpush1.xpose.msra.mxu0 0.0
        %595 = vmatprep.subr.mxu0 0.0
        %596 = vmatpush1.xpose.msra.mxu0 0.0
        %597 = vmatprep.subr.mxu0 0.0
        %598 = vmatpush1.xpose.msra.mxu0 0.0
        %599 = vmatprep.subr.mxu0 0.0
        %600 = vmatpush1.xpose.msra.mxu0 0.0
        %601 = vmatprep.subr.mxu0 0.0
        %602 = vmatpush1.xpose.msra.mxu0 0.0
        %603 = vmatprep.subr.mxu0 0.0
        %604 = vmatpush1.xpose.msra.mxu0 0.0
        %605 = vmatprep.subr.mxu0 0.0
        %606 = vmatpush1.xpose.msra.mxu0 0.0
        %607 = vmatprep.subr.mxu0 0.0
        %608 = vmatpush1.xpose.msra.mxu0 0.0
        %609 = vmatprep.subr.mxu0 0.0
        %610 = vmatpush1.xpose.msra.mxu0 0.0
        %611 = vmatprep.subr.mxu0 0.0
        %612 = vmatpush1.xpose.msra.mxu0 0.0
        %613 = vmatprep.subr.mxu0 0.0
        %614 = vmatpush1.xpose.msra.mxu0 0.0
        %615 = vmatprep.subr.mxu0 0.0
        %v616 = vand.u32 %v283, 4294901760
        %v617 = vsub.f32 %v283, %v616
        %v618 = vand.u32 %v617, 4294901760
        %619 = vmatpush1.xpose.msra.mxu0 %v618
        %620 = vmatprep.subr.mxu0 0.0
        %621 = vmatpush2.xpose.msra.mxu0 0.0
        %622 = vmatprep.subr.mxu0 0.0
        %623 = vmatpush2.xpose.msra.mxu0 0.0
        %624 = vmatprep.subr.mxu0 0.0
        %625 = vmatpush2.xpose.msra.mxu0 0.0
        %626 = vmatprep.subr.mxu0 0.0
        %627 = vmatpush2.xpose.msra.mxu0 0.0
        %628 = vmatprep.subr.mxu0 0.0
        %629 = vmatpush2.xpose.msra.mxu0 0.0
        %630 = vmatprep.subr.mxu0 0.0
        %631 = vmatpush2.xpose.msra.mxu0 0.0
        %632 = vmatprep.subr.mxu0 0.0
        %633 = vmatpush2.xpose.msra.mxu0 0.0
        %634 = vmatprep.subr.mxu0 0.0
        %635 = vmatpush2.xpose.msra.mxu0 0.0
        %636 = vmatprep.subr.mxu0 0.0
        %637 = vmatpush2.xpose.msra.mxu0 0.0
        %638 = vmatprep.subr.mxu0 0.0
        %639 = vmatpush2.xpose.msra.mxu0 0.0
        %640 = vmatprep.subr.mxu0 0.0
        %641 = vmatpush2.xpose.msra.mxu0 0.0
        %642 = vmatprep.subr.mxu0 0.0
        %643 = vmatpush2.xpose.msra.mxu0 0.0
        %644 = vmatprep.subr.mxu0 0.0
        %645 = vmatpush2.xpose.msra.mxu0 0.0
        %646 = vmatprep.subr.mxu0 0.0
        %647 = vmatpush2.xpose.msra.mxu0 0.0
        %648 = vmatprep.subr.mxu0 0.0
        %649 = vmatpush2.xpose.msra.mxu0 0.0
        %650 = vmatprep.subr.mxu0 0.0
        %651 = vmatpush2.xpose.msra.mxu0 0.0
        %652 = vmatprep.mubr.f32.mxu0 0.0
        %v653 = vand.u32 %v283, 4294901760
        %654 = vmatmul.mubr.f32.gmra.mxu0 %v653
        %v655 = vpop.f32.mrf.mxu0
        %v656 = vadd.f32 %v582, %v655
        %v657 = vpop.f32.mrf.mxu0
        %658 = vdwg.mxu0
        %659 = vmatprep.subr.mxu0 0.0
        %660 = vmatpush1.xpose.msra.mxu0 0.0
        %661 = vmatprep.subr.mxu0 0.0
        %662 = vmatpush1.xpose.msra.mxu0 0.0
        %663 = vmatprep.subr.mxu0 0.0
        %664 = vmatpush1.xpose.msra.mxu0 0.0
        %665 = vmatprep.subr.mxu0 0.0
        %666 = vmatpush1.xpose.msra.mxu0 0.0
        %667 = vmatprep.subr.mxu0 0.0
        %668 = vmatpush1.xpose.msra.mxu0 0.0
        %669 = vmatprep.subr.mxu0 0.0
        %670 = vmatpush1.xpose.msra.mxu0 0.0
        %671 = vmatprep.subr.mxu0 0.0
        %672 = vmatpush1.xpose.msra.mxu0 0.0
        %673 = vmatprep.subr.mxu0 0.0
        %674 = vmatpush1.xpose.msra.mxu0 0.0
        %675 = vmatprep.subr.mxu0 0.0
        %676 = vmatpush1.xpose.msra.mxu0 0.0
        %677 = vmatprep.subr.mxu0 0.0
        %678 = vmatpush1.xpose.msra.mxu0 0.0
        %679 = vmatprep.subr.mxu0 0.0
        %680 = vmatpush1.xpose.msra.mxu0 0.0
        %681 = vmatprep.subr.mxu0 0.0
        %682 = vmatpush1.xpose.msra.mxu0 0.0
        %683 = vmatprep.subr.mxu0 0.0
        %684 = vmatpush1.xpose.msra.mxu0 0.0
        %685 = vmatprep.subr.mxu0 0.0
        %686 = vmatpush1.xpose.msra.mxu0 0.0
        %687 = vmatprep.subr.mxu0 0.0
        %688 = vmatpush1.xpose.msra.mxu0 0.0
        %689 = vmatprep.subr.mxu0 0.0
        %v690 = vand.u32 %v283, 4294901760
        %691 = vmatpush1.xpose.msra.mxu0 %v690
        %692 = vmatprep.subr.mxu0 0.0
        %693 = vmatpush2.xpose.msra.mxu0 0.0
        %694 = vmatprep.subr.mxu0 0.0
        %695 = vmatpush2.xpose.msra.mxu0 0.0
        %696 = vmatprep.subr.mxu0 0.0
        %697 = vmatpush2.xpose.msra.mxu0 0.0
        %698 = vmatprep.subr.mxu0 0.0
        %699 = vmatpush2.xpose.msra.mxu0 0.0
        %700 = vmatprep.subr.mxu0 0.0
        %701 = vmatpush2.xpose.msra.mxu0 0.0
        %702 = vmatprep.subr.mxu0 0.0
        %703 = vmatpush2.xpose.msra.mxu0 0.0
        %704 = vmatprep.subr.mxu0 0.0
        %705 = vmatpush2.xpose.msra.mxu0 0.0
        %706 = vmatprep.subr.mxu0 0.0
        %707 = vmatpush2.xpose.msra.mxu0 0.0
        %708 = vmatprep.subr.mxu0 0.0
        %709 = vmatpush2.xpose.msra.mxu0 0.0
        %710 = vmatprep.subr.mxu0 0.0
        %711 = vmatpush2.xpose.msra.mxu0 0.0
        %712 = vmatprep.subr.mxu0 0.0
        %713 = vmatpush2.xpose.msra.mxu0 0.0
        %714 = vmatprep.subr.mxu0 0.0
        %715 = vmatpush2.xpose.msra.mxu0 0.0
        %716 = vmatprep.subr.mxu0 0.0
        %717 = vmatpush2.xpose.msra.mxu0 0.0
        %718 = vmatprep.subr.mxu0 0.0
        %719 = vmatpush2.xpose.msra.mxu0 0.0
        %720 = vmatprep.subr.mxu0 0.0
        %721 = vmatpush2.xpose.msra.mxu0 0.0
        %722 = vmatprep.subr.mxu0 0.0
        %723 = vmatpush2.xpose.msra.mxu0 0.0
        %724 = vmatprep.mubr.f32.mxu0 0.0
        %v725 = vand.u32 %v283, 4294901760
        %726 = vmatmul.mubr.f32.gmra.mxu0 %v725
        %v727 = vpop.f32.mrf.mxu0
        %v728 = vadd.f32 %v656, %v727
        %v729 = vpop.f32.mrf.mxu0
        %730 = vdwg.mxu0
        %v732 = vsel %vm281, %v278, 0
        %734 = vmatprep.subr.mxu0 0.0
        %735 = vmatpush1.xpose.msra.mxu0 0.0
        %736 = vmatprep.subr.mxu0 0.0
        %737 = vmatpush1.xpose.msra.mxu0 0.0
        %738 = vmatprep.subr.mxu0 0.0
        %739 = vmatpush1.xpose.msra.mxu0 0.0
        %740 = vmatprep.subr.mxu0 0.0
        %741 = vmatpush1.xpose.msra.mxu0 0.0
        %742 = vmatprep.subr.mxu0 0.0
        %743 = vmatpush1.xpose.msra.mxu0 0.0
        %744 = vmatprep.subr.mxu0 0.0
        %745 = vmatpush1.xpose.msra.mxu0 0.0
        %746 = vmatprep.subr.mxu0 0.0
        %747 = vmatpush1.xpose.msra.mxu0 0.0
        %748 = vmatprep.subr.mxu0 0.0
        %749 = vmatpush1.xpose.msra.mxu0 0.0
        %750 = vmatprep.subr.mxu0 0.0
        %751 = vmatpush1.xpose.msra.mxu0 0.0
        %752 = vmatprep.subr.mxu0 0.0
        %753 = vmatpush1.xpose.msra.mxu0 0.0
        %754 = vmatprep.subr.mxu0 0.0
        %755 = vmatpush1.xpose.msra.mxu0 0.0
        %756 = vmatprep.subr.mxu0 0.0
        %757 = vmatpush1.xpose.msra.mxu0 0.0
        %758 = vmatprep.subr.mxu0 0.0
        %759 = vmatpush1.xpose.msra.mxu0 0.0
        %760 = vmatprep.subr.mxu0 0.0
        %761 = vmatpush1.xpose.msra.mxu0 0.0
        %762 = vmatprep.subr.mxu0 0.0
        %763 = vmatpush1.xpose.msra.mxu0 0.0
        %764 = vmatprep.subr.mxu0 0.0
        %v765 = vand.u32 %v732, 4294901760
        %766 = vmatpush1.xpose.msra.mxu0 %v765
        %767 = vmatprep.subr.mxu0 0.0
        %768 = vmatpush2.xpose.msra.mxu0 0.0
        %769 = vmatprep.subr.mxu0 0.0
        %770 = vmatpush2.xpose.msra.mxu0 0.0
        %771 = vmatprep.subr.mxu0 0.0
        %772 = vmatpush2.xpose.msra.mxu0 0.0
        %773 = vmatprep.subr.mxu0 0.0
        %774 = vmatpush2.xpose.msra.mxu0 0.0
        %775 = vmatprep.subr.mxu0 0.0
        %776 = vmatpush2.xpose.msra.mxu0 0.0
        %777 = vmatprep.subr.mxu0 0.0
        %778 = vmatpush2.xpose.msra.mxu0 0.0
        %779 = vmatprep.subr.mxu0 0.0
        %780 = vmatpush2.xpose.msra.mxu0 0.0
        %781 = vmatprep.subr.mxu0 0.0
        %782 = vmatpush2.xpose.msra.mxu0 0.0
        %783 = vmatprep.subr.mxu0 0.0
        %784 = vmatpush2.xpose.msra.mxu0 0.0
        %785 = vmatprep.subr.mxu0 0.0
        %786 = vmatpush2.xpose.msra.mxu0 0.0
        %787 = vmatprep.subr.mxu0 0.0
        %788 = vmatpush2.xpose.msra.mxu0 0.0
        %789 = vmatprep.subr.mxu0 0.0
        %790 = vmatpush2.xpose.msra.mxu0 0.0
        %791 = vmatprep.subr.mxu0 0.0
        %792 = vmatpush2.xpose.msra.mxu0 0.0
        %793 = vmatprep.subr.mxu0 0.0
        %794 = vmatpush2.xpose.msra.mxu0 0.0
        %795 = vmatprep.subr.mxu0 0.0
        %796 = vmatpush2.xpose.msra.mxu0 0.0
        %797 = vmatprep.subr.mxu0 0.0
        %798 = vmatpush2.xpose.msra.mxu0 0.0
        %799 = vmatprep.mubr.f32.mxu0 0.0
        %v800 = vand.u32 %v732, 4294901760
        %v801 = vsub.f32 %v732, %v800
        %v802 = vand.u32 %v801, 4294901760
        %v803 = vsub.f32 %v801, %v802
        %v804 = vand.u32 %v803, 4294901760
        %805 = vmatmul.mubr.f32.gmra.mxu0 %v804
        %v806 = vpop.f32.mrf.mxu0
        %v807 = vadd.f32 0.0, %v806
        %v808 = vpop.f32.mrf.mxu0
        %809 = vdwg.mxu0
        %810 = vmatprep.subr.mxu0 0.0
        %811 = vmatpush1.xpose.msra.mxu0 0.0
        %812 = vmatprep.subr.mxu0 0.0
        %813 = vmatpush1.xpose.msra.mxu0 0.0
        %814 = vmatprep.subr.mxu0 0.0
        %815 = vmatpush1.xpose.msra.mxu0 0.0
        %816 = vmatprep.subr.mxu0 0.0
        %817 = vmatpush1.xpose.msra.mxu0 0.0
        %818 = vmatprep.subr.mxu0 0.0
        %819 = vmatpush1.xpose.msra.mxu0 0.0
        %820 = vmatprep.subr.mxu0 0.0
        %821 = vmatpush1.xpose.msra.mxu0 0.0
        %822 = vmatprep.subr.mxu0 0.0
        %823 = vmatpush1.xpose.msra.mxu0 0.0
        %824 = vmatprep.subr.mxu0 0.0
        %825 = vmatpush1.xpose.msra.mxu0 0.0
        %826 = vmatprep.subr.mxu0 0.0
        %827 = vmatpush1.xpose.msra.mxu0 0.0
        %828 = vmatprep.subr.mxu0 0.0
        %829 = vmatpush1.xpose.msra.mxu0 0.0
        %830 = vmatprep.subr.mxu0 0.0
        %831 = vmatpush1.xpose.msra.mxu0 0.0
        %832 = vmatprep.subr.mxu0 0.0
        %833 = vmatpush1.xpose.msra.mxu0 0.0
        %834 = vmatprep.subr.mxu0 0.0
        %835 = vmatpush1.xpose.msra.mxu0 0.0
        %836 = vmatprep.subr.mxu0 0.0
        %837 = vmatpush1.xpose.msra.mxu0 0.0
        %838 = vmatprep.subr.mxu0 0.0
        %839 = vmatpush1.xpose.msra.mxu0 0.0
        %840 = vmatprep.subr.mxu0 0.0
        %v841 = vand.u32 %v732, 4294901760
        %v842 = vsub.f32 %v732, %v841
        %v843 = vand.u32 %v842, 4294901760
        %v844 = vsub.f32 %v842, %v843
        %v845 = vand.u32 %v844, 4294901760
        %846 = vmatpush1.xpose.msra.mxu0 %v845
        %847 = vmatprep.subr.mxu0 0.0
        %848 = vmatpush2.xpose.msra.mxu0 0.0
        %849 = vmatprep.subr.mxu0 0.0
        %850 = vmatpush2.xpose.msra.mxu0 0.0
        %851 = vmatprep.subr.mxu0 0.0
        %852 = vmatpush2.xpose.msra.mxu0 0.0
        %853 = vmatprep.subr.mxu0 0.0
        %854 = vmatpush2.xpose.msra.mxu0 0.0
        %855 = vmatprep.subr.mxu0 0.0
        %856 = vmatpush2.xpose.msra.mxu0 0.0
        %857 = vmatprep.subr.mxu0 0.0
        %858 = vmatpush2.xpose.msra.mxu0 0.0
        %859 = vmatprep.subr.mxu0 0.0
        %860 = vmatpush2.xpose.msra.mxu0 0.0
        %861 = vmatprep.subr.mxu0 0.0
        %862 = vmatpush2.xpose.msra.mxu0 0.0
        %863 = vmatprep.subr.mxu0 0.0
        %864 = vmatpush2.xpose.msra.mxu0 0.0
        %865 = vmatprep.subr.mxu0 0.0
        %866 = vmatpush2.xpose.msra.mxu0 0.0
        %867 = vmatprep.subr.mxu0 0.0
        %868 = vmatpush2.xpose.msra.mxu0 0.0
        %869 = vmatprep.subr.mxu0 0.0
        %870 = vmatpush2.xpose.msra.mxu0 0.0
        %871 = vmatprep.subr.mxu0 0.0
        %872 = vmatpush2.xpose.msra.mxu0 0.0
        %873 = vmatprep.subr.mxu0 0.0
        %874 = vmatpush2.xpose.msra.mxu0 0.0
        %875 = vmatprep.subr.mxu0 0.0
        %876 = vmatpush2.xpose.msra.mxu0 0.0
        %877 = vmatprep.subr.mxu0 0.0
        %878 = vmatpush2.xpose.msra.mxu0 0.0
        %879 = vmatprep.mubr.f32.mxu0 0.0
        %v880 = vand.u32 %v732, 4294901760
        %881 = vmatmul.mubr.f32.gmra.mxu0 %v880
        %v882 = vpop.f32.mrf.mxu0
        %v883 = vadd.f32 %v807, %v882
        %v884 = vpop.f32.mrf.mxu0
        %885 = vdwg.mxu0
        %886 = vmatprep.subr.mxu0 0.0
        %887 = vmatpush1.xpose.msra.mxu0 0.0
        %888 = vmatprep.subr.mxu0 0.0
        %889 = vmatpush1.xpose.msra.mxu0 0.0
        %890 = vmatprep.subr.mxu0 0.0
        %891 = vmatpush1.xpose.msra.mxu0 0.0
        %892 = vmatprep.subr.mxu0 0.0
        %893 = vmatpush1.xpose.msra.mxu0 0.0
        %894 = vmatprep.subr.mxu0 0.0
        %895 = vmatpush1.xpose.msra.mxu0 0.0
        %896 = vmatprep.subr.mxu0 0.0
        %897 = vmatpush1.xpose.msra.mxu0 0.0
        %898 = vmatprep.subr.mxu0 0.0
        %899 = vmatpush1.xpose.msra.mxu0 0.0
        %900 = vmatprep.subr.mxu0 0.0
        %901 = vmatpush1.xpose.msra.mxu0 0.0
        %902 = vmatprep.subr.mxu0 0.0
        %903 = vmatpush1.xpose.msra.mxu0 0.0
        %904 = vmatprep.subr.mxu0 0.0
        %905 = vmatpush1.xpose.msra.mxu0 0.0
        %906 = vmatprep.subr.mxu0 0.0
        %907 = vmatpush1.xpose.msra.mxu0 0.0
        %908 = vmatprep.subr.mxu0 0.0
        %909 = vmatpush1.xpose.msra.mxu0 0.0
        %910 = vmatprep.subr.mxu0 0.0
        %911 = vmatpush1.xpose.msra.mxu0 0.0
        %912 = vmatprep.subr.mxu0 0.0
        %913 = vmatpush1.xpose.msra.mxu0 0.0
        %914 = vmatprep.subr.mxu0 0.0
        %915 = vmatpush1.xpose.msra.mxu0 0.0
        %916 = vmatprep.subr.mxu0 0.0
        %v917 = vand.u32 %v732, 4294901760
        %v918 = vsub.f32 %v732, %v917
        %919 = vmatpush1.xpose.msra.mxu0 %v918
        %920 = vmatprep.subr.mxu0 0.0
        %921 = vmatpush2.xpose.msra.mxu0 0.0
        %922 = vmatprep.subr.mxu0 0.0
        %923 = vmatpush2.xpose.msra.mxu0 0.0
        %924 = vmatprep.subr.mxu0 0.0
        %925 = vmatpush2.xpose.msra.mxu0 0.0
        %926 = vmatprep.subr.mxu0 0.0
        %927 = vmatpush2.xpose.msra.mxu0 0.0
        %928 = vmatprep.subr.mxu0 0.0
        %929 = vmatpush2.xpose.msra.mxu0 0.0
        %930 = vmatprep.subr.mxu0 0.0
        %931 = vmatpush2.xpose.msra.mxu0 0.0
        %932 = vmatprep.subr.mxu0 0.0
        %933 = vmatpush2.xpose.msra.mxu0 0.0
        %934 = vmatprep.subr.mxu0 0.0
        %935 = vmatpush2.xpose.msra.mxu0 0.0
        %936 = vmatprep.subr.mxu0 0.0
        %937 = vmatpush2.xpose.msra.mxu0 0.0
        %938 = vmatprep.subr.mxu0 0.0
        %939 = vmatpush2.xpose.msra.mxu0 0.0
        %940 = vmatprep.subr.mxu0 0.0
        %941 = vmatpush2.xpose.msra.mxu0 0.0
        %942 = vmatprep.subr.mxu0 0.0
        %943 = vmatpush2.xpose.msra.mxu0 0.0
        %944 = vmatprep.subr.mxu0 0.0
        %945 = vmatpush2.xpose.msra.mxu0 0.0
        %946 = vmatprep.subr.mxu0 0.0
        %947 = vmatpush2.xpose.msra.mxu0 0.0
        %948 = vmatprep.subr.mxu0 0.0
        %949 = vmatpush2.xpose.msra.mxu0 0.0
        %950 = vmatprep.subr.mxu0 0.0
        %951 = vmatpush2.xpose.msra.mxu0 0.0
        %952 = vmatprep.mubr.f32.mxu0 0.0
        %v953 = vand.u32 %v732, 4294901760
        %v954 = vsub.f32 %v732, %v953
        %955 = vmatmul.mubr.f32.gmra.mxu0 %v954
        %v956 = vpop.f32.mrf.mxu0
        %v957 = vadd.f32 %v883, %v956
        %v958 = vpop.f32.mrf.mxu0
        %959 = vdwg.mxu0
        %960 = vmatprep.subr.mxu0 0.0
        %961 = vmatpush1.xpose.msra.mxu0 0.0
        %962 = vmatprep.subr.mxu0 0.0
        %963 = vmatpush1.xpose.msra.mxu0 0.0
        %964 = vmatprep.subr.mxu0 0.0
        %965 = vmatpush1.xpose.msra.mxu0 0.0
        %966 = vmatprep.subr.mxu0 0.0
        %967 = vmatpush1.xpose.msra.mxu0 0.0
        %968 = vmatprep.subr.mxu0 0.0
        %969 = vmatpush1.xpose.msra.mxu0 0.0
        %970 = vmatprep.subr.mxu0 0.0
        %971 = vmatpush1.xpose.msra.mxu0 0.0
        %972 = vmatprep.subr.mxu0 0.0
        %973 = vmatpush1.xpose.msra.mxu0 0.0
        %974 = vmatprep.subr.mxu0 0.0
        %975 = vmatpush1.xpose.msra.mxu0 0.0
        %976 = vmatprep.subr.mxu0 0.0
        %977 = vmatpush1.xpose.msra.mxu0 0.0
        %978 = vmatprep.subr.mxu0 0.0
        %979 = vmatpush1.xpose.msra.mxu0 0.0
        %980 = vmatprep.subr.mxu0 0.0
        %981 = vmatpush1.xpose.msra.mxu0 0.0
        %982 = vmatprep.subr.mxu0 0.0
        %983 = vmatpush1.xpose.msra.mxu0 0.0
        %984 = vmatprep.subr.mxu0 0.0
        %985 = vmatpush1.xpose.msra.mxu0 0.0
        %986 = vmatprep.subr.mxu0 0.0
        %987 = vmatpush1.xpose.msra.mxu0 0.0
        %988 = vmatprep.subr.mxu0 0.0
        %989 = vmatpush1.xpose.msra.mxu0 0.0
        %990 = vmatprep.subr.mxu0 0.0
        %v991 = vand.u32 %v732, 4294901760
        %992 = vmatpush1.xpose.msra.mxu0 %v991
        %993 = vmatprep.subr.mxu0 0.0
        %994 = vmatpush2.xpose.msra.mxu0 0.0
        %995 = vmatprep.subr.mxu0 0.0
        %996 = vmatpush2.xpose.msra.mxu0 0.0
        %997 = vmatprep.subr.mxu0 0.0
        %998 = vmatpush2.xpose.msra.mxu0 0.0
        %999 = vmatprep.subr.mxu0 0.0
        %1000 = vmatpush2.xpose.msra.mxu0 0.0
        %1001 = vmatprep.subr.mxu0 0.0
        %1002 = vmatpush2.xpose.msra.mxu0 0.0
        %1003 = vmatprep.subr.mxu0 0.0
        %1004 = vmatpush2.xpose.msra.mxu0 0.0
        %1005 = vmatprep.subr.mxu0 0.0
        %1006 = vmatpush2.xpose.msra.mxu0 0.0
        %1007 = vmatprep.subr.mxu0 0.0
        %1008 = vmatpush2.xpose.msra.mxu0 0.0
        %1009 = vmatprep.subr.mxu0 0.0
        %1010 = vmatpush2.xpose.msra.mxu0 0.0
        %1011 = vmatprep.subr.mxu0 0.0
        %1012 = vmatpush2.xpose.msra.mxu0 0.0
        %1013 = vmatprep.subr.mxu0 0.0
        %1014 = vmatpush2.xpose.msra.mxu0 0.0
        %1015 = vmatprep.subr.mxu0 0.0
        %1016 = vmatpush2.xpose.msra.mxu0 0.0
        %1017 = vmatprep.subr.mxu0 0.0
        %1018 = vmatpush2.xpose.msra.mxu0 0.0
        %1019 = vmatprep.subr.mxu0 0.0
        %1020 = vmatpush2.xpose.msra.mxu0 0.0
        %1021 = vmatprep.subr.mxu0 0.0
        %1022 = vmatpush2.xpose.msra.mxu0 0.0
        %1023 = vmatprep.subr.mxu0 0.0
        %1024 = vmatpush2.xpose.msra.mxu0 0.0
        %1025 = vmatprep.mubr.f32.mxu0 0.0
        %v1026 = vand.u32 %v732, 4294901760
        %v1027 = vsub.f32 %v732, %v1026
        %v1028 = vand.u32 %v1027, 4294901760
        %1029 = vmatmul.mubr.f32.gmra.mxu0 %v1028
        %v1030 = vpop.f32.mrf.mxu0
        %v1031 = vadd.f32 %v957, %v1030
        %v1032 = vpop.f32.mrf.mxu0
        %1033 = vdwg.mxu0
        %1034 = vmatprep.subr.mxu0 0.0
        %1035 = vmatpush1.xpose.msra.mxu0 0.0
        %1036 = vmatprep.subr.mxu0 0.0
        %1037 = vmatpush1.xpose.msra.mxu0 0.0
        %1038 = vmatprep.subr.mxu0 0.0
        %1039 = vmatpush1.xpose.msra.mxu0 0.0
        %1040 = vmatprep.subr.mxu0 0.0
        %1041 = vmatpush1.xpose.msra.mxu0 0.0
        %1042 = vmatprep.subr.mxu0 0.0
        %1043 = vmatpush1.xpose.msra.mxu0 0.0
        %1044 = vmatprep.subr.mxu0 0.0
        %1045 = vmatpush1.xpose.msra.mxu0 0.0
        %1046 = vmatprep.subr.mxu0 0.0
        %1047 = vmatpush1.xpose.msra.mxu0 0.0
        %1048 = vmatprep.subr.mxu0 0.0
        %1049 = vmatpush1.xpose.msra.mxu0 0.0
        %1050 = vmatprep.subr.mxu0 0.0
        %1051 = vmatpush1.xpose.msra.mxu0 0.0
        %1052 = vmatprep.subr.mxu0 0.0
        %1053 = vmatpush1.xpose.msra.mxu0 0.0
        %1054 = vmatprep.subr.mxu0 0.0
        %1055 = vmatpush1.xpose.msra.mxu0 0.0
        %1056 = vmatprep.subr.mxu0 0.0
        %1057 = vmatpush1.xpose.msra.mxu0 0.0
        %1058 = vmatprep.subr.mxu0 0.0
        %1059 = vmatpush1.xpose.msra.mxu0 0.0
        %1060 = vmatprep.subr.mxu0 0.0
        %1061 = vmatpush1.xpose.msra.mxu0 0.0
        %1062 = vmatprep.subr.mxu0 0.0
        %1063 = vmatpush1.xpose.msra.mxu0 0.0
        %1064 = vmatprep.subr.mxu0 0.0
        %v1065 = vand.u32 %v732, 4294901760
        %v1066 = vsub.f32 %v732, %v1065
        %v1067 = vand.u32 %v1066, 4294901760
        %1068 = vmatpush1.xpose.msra.mxu0 %v1067
        %1069 = vmatprep.subr.mxu0 0.0
        %1070 = vmatpush2.xpose.msra.mxu0 0.0
        %1071 = vmatprep.subr.mxu0 0.0
        %1072 = vmatpush2.xpose.msra.mxu0 0.0
        %1073 = vmatprep.subr.mxu0 0.0
        %1074 = vmatpush2.xpose.msra.mxu0 0.0
        %1075 = vmatprep.subr.mxu0 0.0
        %1076 = vmatpush2.xpose.msra.mxu0 0.0
        %1077 = vmatprep.subr.mxu0 0.0
        %1078 = vmatpush2.xpose.msra.mxu0 0.0
        %1079 = vmatprep.subr.mxu0 0.0
        %1080 = vmatpush2.xpose.msra.mxu0 0.0
        %1081 = vmatprep.subr.mxu0 0.0
        %1082 = vmatpush2.xpose.msra.mxu0 0.0
        %1083 = vmatprep.subr.mxu0 0.0
        %1084 = vmatpush2.xpose.msra.mxu0 0.0
        %1085 = vmatprep.subr.mxu0 0.0
        %1086 = vmatpush2.xpose.msra.mxu0 0.0
        %1087 = vmatprep.subr.mxu0 0.0
        %1088 = vmatpush2.xpose.msra.mxu0 0.0
        %1089 = vmatprep.subr.mxu0 0.0
        %1090 = vmatpush2.xpose.msra.mxu0 0.0
        %1091 = vmatprep.subr.mxu0 0.0
        %1092 = vmatpush2.xpose.msra.mxu0 0.0
        %1093 = vmatprep.subr.mxu0 0.0
        %1094 = vmatpush2.xpose.msra.mxu0 0.0
        %1095 = vmatprep.subr.mxu0 0.0
        %1096 = vmatpush2.xpose.msra.mxu0 0.0
        %1097 = vmatprep.subr.mxu0 0.0
        %1098 = vmatpush2.xpose.msra.mxu0 0.0
        %1099 = vmatprep.subr.mxu0 0.0
        %1100 = vmatpush2.xpose.msra.mxu0 0.0
        %1101 = vmatprep.mubr.f32.mxu0 0.0
        %v1102 = vand.u32 %v732, 4294901760
        %1103 = vmatmul.mubr.f32.gmra.mxu0 %v1102
        %v1104 = vpop.f32.mrf.mxu0
        %v1105 = vadd.f32 %v1031, %v1104
        %v1106 = vpop.f32.mrf.mxu0
        %1107 = vdwg.mxu0
        %1108 = vmatprep.subr.mxu0 0.0
        %1109 = vmatpush1.xpose.msra.mxu0 0.0
        %1110 = vmatprep.subr.mxu0 0.0
        %1111 = vmatpush1.xpose.msra.mxu0 0.0
        %1112 = vmatprep.subr.mxu0 0.0
        %1113 = vmatpush1.xpose.msra.mxu0 0.0
        %1114 = vmatprep.subr.mxu0 0.0
        %1115 = vmatpush1.xpose.msra.mxu0 0.0
        %1116 = vmatprep.subr.mxu0 0.0
        %1117 = vmatpush1.xpose.msra.mxu0 0.0
        %1118 = vmatprep.subr.mxu0 0.0
        %1119 = vmatpush1.xpose.msra.mxu0 0.0
        %1120 = vmatprep.subr.mxu0 0.0
        %1121 = vmatpush1.xpose.msra.mxu0 0.0
        %1122 = vmatprep.subr.mxu0 0.0
        %1123 = vmatpush1.xpose.msra.mxu0 0.0
        %1124 = vmatprep.subr.mxu0 0.0
        %1125 = vmatpush1.xpose.msra.mxu0 0.0
        %1126 = vmatprep.subr.mxu0 0.0
        %1127 = vmatpush1.xpose.msra.mxu0 0.0
        %1128 = vmatprep.subr.mxu0 0.0
        %1129 = vmatpush1.xpose.msra.mxu0 0.0
        %1130 = vmatprep.subr.mxu0 0.0
        %1131 = vmatpush1.xpose.msra.mxu0 0.0
        %1132 = vmatprep.subr.mxu0 0.0
        %1133 = vmatpush1.xpose.msra.mxu0 0.0
        %1134 = vmatprep.subr.mxu0 0.0
        %1135 = vmatpush1.xpose.msra.mxu0 0.0
        %1136 = vmatprep.subr.mxu0 0.0
        %1137 = vmatpush1.xpose.msra.mxu0 0.0
        %1138 = vmatprep.subr.mxu0 0.0
        %v1139 = vand.u32 %v732, 4294901760
        %1140 = vmatpush1.xpose.msra.mxu0 %v1139
        %1141 = vmatprep.subr.mxu0 0.0
        %1142 = vmatpush2.xpose.msra.mxu0 0.0
        %1143 = vmatprep.subr.mxu0 0.0
        %1144 = vmatpush2.xpose.msra.mxu0 0.0
        %1145 = vmatprep.subr.mxu0 0.0
        %1146 = vmatpush2.xpose.msra.mxu0 0.0
        %1147 = vmatprep.subr.mxu0 0.0
        %1148 = vmatpush2.xpose.msra.mxu0 0.0
        %1149 = vmatprep.subr.mxu0 0.0
        %1150 = vmatpush2.xpose.msra.mxu0 0.0
        %1151 = vmatprep.subr.mxu0 0.0
        %1152 = vmatpush2.xpose.msra.mxu0 0.0
        %1153 = vmatprep.subr.mxu0 0.0
        %1154 = vmatpush2.xpose.msra.mxu0 0.0
        %1155 = vmatprep.subr.mxu0 0.0
        %1156 = vmatpush2.xpose.msra.mxu0 0.0
        %1157 = vmatprep.subr.mxu0 0.0
        %1158 = vmatpush2.xpose.msra.mxu0 0.0
        %1159 = vmatprep.subr.mxu0 0.0
        %1160 = vmatpush2.xpose.msra.mxu0 0.0
        %1161 = vmatprep.subr.mxu0 0.0
        %1162 = vmatpush2.xpose.msra.mxu0 0.0
        %1163 = vmatprep.subr.mxu0 0.0
        %1164 = vmatpush2.xpose.msra.mxu0 0.0
        %1165 = vmatprep.subr.mxu0 0.0
        %1166 = vmatpush2.xpose.msra.mxu0 0.0
        %1167 = vmatprep.subr.mxu0 0.0
        %1168 = vmatpush2.xpose.msra.mxu0 0.0
        %1169 = vmatprep.subr.mxu0 0.0
        %1170 = vmatpush2.xpose.msra.mxu0 0.0
        %1171 = vmatprep.subr.mxu0 0.0
        %1172 = vmatpush2.xpose.msra.mxu0 0.0
        %1173 = vmatprep.mubr.f32.mxu0 0.0
        %v1174 = vand.u32 %v732, 4294901760
        %1175 = vmatmul.mubr.f32.gmra.mxu0 %v1174
        %v1176 = vpop.f32.mrf.mxu0
        %v1177 = vadd.f32 %v1105, %v1176
        %v1178 = vpop.f32.mrf.mxu0
        %1179 = vdwg.mxu0
        %1180 = vxpose.xlu0.b32.start [1/16] %v279, 128
        %1181 = vxpose.xlu0.b32.cont [2/16] 0.0, 128
        %1182 = vxpose.xlu0.b32.cont [3/16] 0.0, 128
        %1183 = vxpose.xlu0.b32.cont [4/16] 0.0, 128
        %1184 = vxpose.xlu0.b32.cont [5/16] 0.0, 128
        %1185 = vxpose.xlu0.b32.cont [6/16] 0.0, 128
        %1186 = vxpose.xlu0.b32.cont [7/16] 0.0, 128
        %1187 = vxpose.xlu0.b32.cont [8/16] 0.0, 128
        %1188 = vxpose.xlu0.b32.cont [9/16] 0.0, 128
        %1189 = vxpose.xlu0.b32.cont [10/16] 0.0, 128
        %1190 = vxpose.xlu0.b32.cont [11/16] 0.0, 128
        %1191 = vxpose.xlu0.b32.cont [12/16] 0.0, 128
        %1192 = vxpose.xlu0.b32.cont [13/16] 0.0, 128
        %1193 = vxpose.xlu0.b32.cont [14/16] 0.0, 128
        %1194 = vxpose.xlu0.b32.cont [15/16] 0.0, 128
        %1195 = vxpose.xlu0.b32.end [16/16] 0.0, 128
        %v1196 = vpop.trf.xlu0
        %v1197 = vpop.trf.xlu0
        %v1198 = vpop.trf.xlu0
        %v1199 = vpop.trf.xlu0
        %v1200 = vpop.trf.xlu0
        %v1201 = vpop.trf.xlu0
        %v1202 = vpop.trf.xlu0
        %v1203 = vpop.trf.xlu0
        %v1204 = vpop.trf.xlu0
        %v1205 = vpop.trf.xlu0
        %v1206 = vpop.trf.xlu0
        %v1207 = vpop.trf.xlu0
        %v1208 = vpop.trf.xlu0
        %v1209 = vpop.trf.xlu0
        %v1210 = vpop.trf.xlu0
        %v1211 = vpop.trf.xlu0
        %1212 = vxpose.xlu0.b32.start [1/16] %v280, 128
        %1213 = vxpose.xlu0.b32.cont [2/16] 0.0, 128
        %1214 = vxpose.xlu0.b32.cont [3/16] 0.0, 128
        %1215 = vxpose.xlu0.b32.cont [4/16] 0.0, 128
        %1216 = vxpose.xlu0.b32.cont [5/16] 0.0, 128
        %1217 = vxpose.xlu0.b32.cont [6/16] 0.0, 128
        %1218 = vxpose.xlu0.b32.cont [7/16] 0.0, 128
        %1219 = vxpose.xlu0.b32.cont [8/16] 0.0, 128
        %1220 = vxpose.xlu0.b32.cont [9/16] 0.0, 128
        %1221 = vxpose.xlu0.b32.cont [10/16] 0.0, 128
        %1222 = vxpose.xlu0.b32.cont [11/16] 0.0, 128
        %1223 = vxpose.xlu0.b32.cont [12/16] 0.0, 128
        %1224 = vxpose.xlu0.b32.cont [13/16] 0.0, 128
        %1225 = vxpose.xlu0.b32.cont [14/16] 0.0, 128
        %1226 = vxpose.xlu0.b32.cont [15/16] 0.0, 128
        %1227 = vxpose.xlu0.b32.end [16/16] 0.0, 128
        %v1228 = vpop.trf.xlu0
        %v1229 = vpop.trf.xlu0
        %v1230 = vpop.trf.xlu0
        %v1231 = vpop.trf.xlu0
        %v1232 = vpop.trf.xlu0
        %v1233 = vpop.trf.xlu0
        %v1234 = vpop.trf.xlu0
        %v1235 = vpop.trf.xlu0
        %v1236 = vpop.trf.xlu0
        %v1237 = vpop.trf.xlu0
        %v1238 = vpop.trf.xlu0
        %v1239 = vpop.trf.xlu0
        %v1240 = vpop.trf.xlu0
        %v1241 = vpop.trf.xlu0
        %v1242 = vpop.trf.xlu0
        %v1243 = vpop.trf.xlu0
        %1245 = vset.pattern.permute.xlu0 0
        %1246 = vperm.xlu0 %1245, %v279
        %v1247 = vpop.permute.xlu0 %1246
        %1250 = vset.pattern.permute.xlu0 0
        %1251 = vperm.xlu0 %1250, %v280
        %v1252 = vpop.permute.xlu0 %1251
        %v1254 = vlaneseq
        %v1255 = vshrl.u32 %v1254, 7
        %v1256 = vsub.s32 0, %v1255
        %v1257 = vrot.slane %v1196, %v1256
        %v1258 = vlaneseq
        %v1259 = vshrl.u32 %v1258, 7
        %v1260 = vsub.s32 0, %v1259
        %v1261 = vrot.slane %v1228, %v1260
        %v1262 = vadd.f32 %v1247, %v1257
        %v1263 = vadd.f32 %v1252, %v1261
        %v1264 = vmul.f32 %v728, 2.0
        %v1265 = vmul.f32 %v1177, 2.0
        %v1266 = vsub.f32 %v1262, %v1264
        %v1267 = vsub.f32 %v1263, %v1265
        %v1268 = vmax.f32 %v1266, 0.0
        %v1269 = vmax.f32 %v1267, 0.0
        %v1270 = vrsqrt.pop %v1268
        %v1271 = vmul.f32 %v1268, %v1270
        %vm1272 = vcmp.eq.f32.partialorder %v1268, inf
        %v1273 = vsel %vm1272, %v1268, %v1271
        %vm1274 = vcmp.eq.f32.partialorder %v1268, 0.0
        %v1275 = vand.u32 %v1268, 2147483648
        %v1276 = vsel %vm1274, %v1275, %v1273
        %v1277 = vrsqrt.pop %v1269
        %v1278 = vmul.f32 %v1269, %v1277
        %vm1279 = vcmp.eq.f32.partialorder %v1269, inf
        %v1280 = vsel %vm1279, %v1269, %v1278
        %vm1281 = vcmp.eq.f32.partialorder %v1269, 0.0
        %v1282 = vand.u32 %v1269, 2147483648
        %v1283 = vsel %vm1281, %v1282, %v1280
        %v1284 = vld [vmem:[%s233] sm:$0xff]
        %v1285 = vld [vmem:[%s233 + $0x8] sm:$0xff]
        %v1286 = vld [vmem:[%s227] sm:$0x1]
        %v1287 = vld [vmem:[%s227 + $0x1] sm:$0x1]
        %1288 = vset.pattern.permute.xlu0 0
        %1289 = vperm.xlu0 %1288, %v1284
        %v1290 = vpop.permute.xlu0 %1289
        %1291 = vset.pattern.permute.xlu0 0
        %1292 = vperm.xlu0 %1291, %v1285
        %v1293 = vpop.permute.xlu0 %1292
        %v1294 = vlaneseq
        %v1295 = vshrl.u32 %v1294, 7
        %v1296 = vsub.s32 0, %v1295
        %v1297 = vrot.slane %v1286, %v1296
        %v1298 = vlaneseq
        %v1299 = vshrl.u32 %v1298, 7
        %v1300 = vsub.s32 0, %v1299
        %v1301 = vrot.slane %v1287, %v1300
        %vm1302 = vcmp.eq.s32.totalorder %v1290, %v1297
        %vm1303 = vcmp.eq.s32.totalorder %v1293, %v1301
        %v1304 = vsub.f32 %v1276, 0.2
        %v1305 = vsub.f32 %v1283, 0.2
        %v1306 = vsub.f32 0.7, %v1276
        %v1307 = vsub.f32 0.7, %v1283
        %v1308 = vsel %vm1302, %v1304, %v1306
        %v1309 = vsel %vm1303, %v1305, %v1307
        %v1310 = vmax.f32 %v1308, 0.0
        %v1311 = vmax.f32 %v1309, 0.0
        %vm1312 = vcmp.gt.f32.partialorder %v1310, 0.0
        %vm1313 = vcmp.gt.f32.partialorder %v1311, 0.0
        %v1314 = vsel %vm1312, 1, 0
        %v1315 = vsel %vm1313, 1, 0
        %v1316 = vcvt.s32.f32 %v1314
        %v1317 = vcvt.s32.f32 %v1315
        %v1318 = vsel %vm1302, %v1310, 0.0
        %v1319 = vsel %vm1303, %v1311, 0.0
        %v1320 = vsel %vm1302, %v1316, 0.0
        %v1321 = vsel %vm1303, %v1317, 0.0
        %vm1322 = vcmask 64512
        %v1323 = vsel %vm1322, %v1310, 0.0
        %1324 = vadd.xlane.f32.xlu0 %v1323
        %v1325 = vpop.xlane.xlu0 %1324
        %v1326 = vsel %vm1322, %v1311, 0.0
        %1327 = vadd.xlane.f32.xlu0 %v1326
        %v1328 = vpop.xlane.xlu0 %1327
        %v1329 = vrot.slane %v1325, 4
        %v1330 = vadd.f32 %v1325, %v1329
        %v1331 = vrot.slane %v1330, 2
        %v1332 = vadd.f32 %v1330, %v1331
        %v1333 = vrot.slane %v1332, 1
        %v1334 = vadd.f32 %v1332, %v1333
        %v1335 = vrot.slane %v1328, 4
        %v1336 = vadd.f32 %v1328, %v1335
        %v1337 = vrot.slane %v1336, 2
        %v1338 = vadd.f32 %v1336, %v1337
        %v1339 = vrot.slane %v1338, 1
        %v1340 = vadd.f32 %v1338, %v1339
        %v1341 = vsel %vm1322, %v1316, 0.0
        %1342 = vadd.xlane.f32.xlu0 %v1341
        %v1343 = vpop.xlane.xlu0 %1342
        %v1344 = vsel %vm1322, %v1317, 0.0
        %1345 = vadd.xlane.f32.xlu0 %v1344
        %v1346 = vpop.xlane.xlu0 %1345
        %v1347 = vrot.slane %v1343, 4
        %v1348 = vadd.f32 %v1343, %v1347
        %v1349 = vrot.slane %v1348, 2
        %v1350 = vadd.f32 %v1348, %v1349
        %v1351 = vrot.slane %v1350, 1
        %v1352 = vadd.f32 %v1350, %v1351
        %v1353 = vrot.slane %v1346, 4
        %v1354 = vadd.f32 %v1346, %v1353
        %v1355 = vrot.slane %v1354, 2
        %v1356 = vadd.f32 %v1354, %v1355
        %v1357 = vrot.slane %v1356, 1
        %v1358 = vadd.f32 %v1356, %v1357
        %v1359 = vsel %vm1322, %v1318, 0.0
        %1360 = vadd.xlane.f32.xlu0 %v1359
        %v1361 = vpop.xlane.xlu0 %1360
        %v1362 = vsel %vm1322, %v1319, 0.0
        %1363 = vadd.xlane.f32.xlu0 %v1362
        %v1364 = vpop.xlane.xlu0 %1363
        %v1365 = vrot.slane %v1361, 4
        %v1366 = vadd.f32 %v1361, %v1365
        %v1367 = vrot.slane %v1366, 2
        %v1368 = vadd.f32 %v1366, %v1367
        %v1369 = vrot.slane %v1368, 1
        %v1370 = vadd.f32 %v1368, %v1369
        %v1371 = vrot.slane %v1364, 4
        %v1372 = vadd.f32 %v1364, %v1371
        %v1373 = vrot.slane %v1372, 2
        %v1374 = vadd.f32 %v1372, %v1373
        %v1375 = vrot.slane %v1374, 1
        %v1376 = vadd.f32 %v1374, %v1375
        %v1377 = vsel %vm1322, %v1320, 0.0
        %1378 = vadd.xlane.f32.xlu0 %v1377
        %v1379 = vpop.xlane.xlu0 %1378
        %v1380 = vsel %vm1322, %v1321, 0.0
        %1381 = vadd.xlane.f32.xlu0 %v1380
        %v1382 = vpop.xlane.xlu0 %1381
        %v1383 = vrot.slane %v1379, 4
        %v1384 = vadd.f32 %v1379, %v1383
        %v1385 = vrot.slane %v1384, 2
        %v1386 = vadd.f32 %v1384, %v1385
        %v1387 = vrot.slane %v1386, 1
        %v1388 = vadd.f32 %v1386, %v1387
        %v1389 = vrot.slane %v1382, 4
        %v1390 = vadd.f32 %v1382, %v1389
        %v1391 = vrot.slane %v1390, 2
        %v1392 = vadd.f32 %v1390, %v1391
        %v1393 = vrot.slane %v1392, 1
        %v1394 = vadd.f32 %v1392, %v1393
        %v1395 = vld [vmem:[#allocation4] sm:$0x1]
        %v1396 = vld [vmem:[#allocation4 + $0x1] sm:$0x1]
        %v1397 = vadd.f32 %v1395, %v1370
        %v1398 = vadd.f32 %v1396, %v1376
        %vm1399 = vcmask 0
        %1400 = vst.msk [vmem:[#allocation4] sm:$0x1] %vm1399, %v1397
        %1401 = vst.msk [vmem:[#allocation4 + $0x1] sm:$0x1] %vm1399, %v1398
        %v1402 = vld [vmem:[#allocation4] sm:$0x1]
        %v1403 = vld [vmem:[#allocation4 + $0x1] sm:$0x1]
        %v1404 = vsub.f32 %v1334, %v1370
        %v1405 = vsub.f32 %v1340, %v1376
        %v1406 = vadd.f32 %v1402, %v1404
        %v1407 = vadd.f32 %v1403, %v1405
        %vm1408 = vcmask 8200
        %1409 = vst.msk [vmem:[#allocation4] sm:$0x1] %vm1408, %v1406
        %1410 = vst.msk [vmem:[#allocation4 + $0x1] sm:$0x1] %vm1408, %v1407
        %v1411 = vld [vmem:[#allocation4] sm:$0x1]
        %v1412 = vld [vmem:[#allocation4 + $0x1] sm:$0x1]
        %v1413 = vadd.f32 %v1411, %v1388
        %v1414 = vadd.f32 %v1412, %v1394
        %vm1415 = vcmask 16400
        %1416 = vst.msk [vmem:[#allocation4] sm:$0x1] %vm1415, %v1413
        %1417 = vst.msk [vmem:[#allocation4 + $0x1] sm:$0x1] %vm1415, %v1414
        %v1418 = vld [vmem:[#allocation4] sm:$0x1]
        %v1419 = vld [vmem:[#allocation4 + $0x1] sm:$0x1]
        %v1420 = vsub.f32 %v1352, %v1388
        %v1421 = vsub.f32 %v1358, %v1394
        %v1422 = vadd.f32 %v1418, %v1420
        %v1423 = vadd.f32 %v1419, %v1421
        %vm1424 = vcmask 24600
        %1425 = vst.msk [vmem:[#allocation4] sm:$0x1] %vm1424, %v1422
        %1426 = vst.msk [vmem:[#allocation4 + $0x1] sm:$0x1] %vm1424, %v1423
        // Predicated region
        $region37: #{tpu_custom_call.1} parent=31 // pred_check
          %p1427 = pneg %p236
        $region38: #{tpu_custom_call.1} parent=31 // pred_check_branch
          %1429 = sbr.rel (%p1427) target = $region40
        $region39: #{tpu_custom_call.1} parent=31 // pred_region
          %v1430 = vld [vmem:[#allocation4] sm:$0x1]
          %v1431 = vld [vmem:[#allocation4 + $0x1] sm:$0x1]
          %vm1432 = vcmp.eq.f32.partialorder %v1430, 0.0
          %vm1433 = vcmp.eq.f32.partialorder %v1431, 0.0
          %v1434 = vmax.f32 %v1430, 1.0
          %v1435 = vmax.f32 %v1431, 1.0
          %1438 = vrot.lane.b32.xlu0 %v1434, 126
          %v1439 = vpop.permute.xlu0 %1438
          %1440 = vrot.lane.b32.xlu0 %v1435, 126
          %v1441 = vpop.permute.xlu0 %1440
          %v1444 = vrcp.pop %v1439
          %v1445 = vmul.f32 %v1430, %v1444
          %v1446 = vrcp.pop %v1441
          %v1447 = vmul.f32 %v1431, %v1446
          %1450 = vrot.lane.b32.xlu0 %v1445, 2
          %v1451 = vpop.permute.xlu0 %1450
          %1452 = vrot.lane.b32.xlu0 %v1447, 2
          %v1453 = vpop.permute.xlu0 %1452
          %v1456 = vsel %vm1432, 0.0, %v1451
          %v1457 = vsel %vm1433, 0.0, %v1453
          %v1460 = vlaneseq
          %v1461 = vshrl.u32 %v1460, 7
          %v1462 = vsub.s32 0, %v1461
          %v1463 = vrot.slane %v1456, %v1462
          %v1464 = vlaneseq
          %v1465 = vshrl.u32 %v1464, 7
          %v1466 = vsub.s32 0, %v1465
          %v1467 = vrot.slane %v1457, %v1466
          %1468 = vrot.lane.b32.xlu0 %v1463, 126
          %v1469 = vpop.permute.xlu0 %1468
          %1470 = vrot.lane.b32.xlu0 %v1467, 126
          %v1471 = vpop.permute.xlu0 %1470
          %1474 = vst.msk [vmem:[%s214] sm:$0x1] %vm1399, %v1469
          %1475 = vst.msk [vmem:[%s214 + $0x1] sm:$0x1] %vm1399, %v1471
          %1476 = vst.msk [vmem:[%s214] sm:$0x1] %vm1408, %v1469
          %1477 = vst.msk [vmem:[%s214 + $0x1] sm:$0x1] %vm1408, %v1471
          %1478 = vst.msk [vmem:[%s214] sm:$0x1] %vm1415, %v1430
          %1479 = vst.msk [vmem:[%s214 + $0x1] sm:$0x1] %vm1415, %v1431
          %1480 = vst.msk [vmem:[%s214] sm:$0x1] %vm1424, %v1430
          %1481 = vst.msk [vmem:[%s214 + $0x1] sm:$0x1] %vm1424, %v1431
        $region40: #{tpu_custom_call.1} parent=31 // pred_fallthru
          _
        %s1482 = sand.u32 %s117, 1
        %s1483 = scalar_lea.sflag [#allocation6], %s1482
        %s1484 = sand.u32 %s117, 1
        %s1485 = smul.addr %s1484, 2
        %s1486 = scalar_lea.vmem [#allocation5], %s1485
        // Predicated region
        $region41: #{tpu_custom_call.1} parent=31 // pred_check
          %p1487 = pneg %p127
        $region42: #{tpu_custom_call.1} parent=31 // pred_check_branch
          %1489 = sbr.rel (%p1487) target = $region44
        $region43: #{tpu_custom_call.1} parent=31 // pred_region
          %s1490 = smul.u32 2, %s21
          %s1492 = ssub.s32 32, 32
          %1493 = vsyncadd %s1483, %s1492
          %s1494 = smul.addr %s1490, 16
          %s1495 = scalar_lea.hbm %s3, %s1494
          %s1496 = sshll.u32 %s1486, 4
          %s1497 = int_to_ptr.vmem [resolvable:$true] %s1496
          %1502 = dma.vmem_to_hbm [thread:$0]  %s1497, 32, %s1495, %s1483, 16, 16, 1
        $region44: #{tpu_custom_call.1} parent=31 // pred_fallthru
          _
      $region32: #{tpu_custom_call.1} parent=5 // pred_fallthru
        _
      %p1503 = scmp.le.s32.totalorder 2, %s12
      // Predicated region
      $region45: #{tpu_custom_call.1} parent=5 // pred_check
        %p1504 = pneg %p1503
      $region46: #{tpu_custom_call.1} parent=5 // pred_check_branch
        %1506 = sbr.rel (%p1504) target = $region48
      $region47: #{tpu_custom_call.1} parent=5 // pred_region
        %s1507 = ssub.s32 %s12, 2
        // Predicated region
        $region49: #{tpu_custom_call.1} parent=47 // pred_check
          %p1508 = pneg %p133
        $region50: #{tpu_custom_call.1} parent=47 // pred_check_branch
          %1510 = sbr.rel (%p1508) target = $region52
        $region51: #{tpu_custom_call.1} parent=47 // pred_region
          %s1511 = sand.u32 %s118, 1
          %s1512 = scalar_lea.sflag [#allocation6], %s1511
          %s1513 = sand.u32 %s118, 1
          %s1514 = smul.addr %s1513, 2
          %s1515 = scalar_lea.vmem [#allocation5], %s1514
          %1516 = dma.done %s1512, 32
        $region52: #{tpu_custom_call.1} parent=47 // pred_fallthru
          _
      $region48: #{tpu_custom_call.1} parent=5 // pred_fallthru
        _
    $region6: #{tpu_custom_call.1} parent=1 // loop_footer
      %s16 = sadd.s32 1, %s12
    $region7: #{tpu_custom_call.1} parent=1 // loop_footer_branch
      %11 = sbr.rel target = $region3
    $region8: #{tpu_custom_call.1} parent=1 // loop_exit
      _
    %1517 = vsyncpa [#allocation6], 1
    %s1518 = scalar_lea.sflag [#allocation6], 1
    %1519 = vsyncpa %s1518, 1

</llo_original>
